<compile_context>
chip_gen: v6e
topology: v6e:2x2x1
jax: 0.10.0
libtpu: 0.0.40
codegen_flags: <defaults>
</compile_context>

<pallas_src>
import jax
import jax.numpy as jnp
import numpy as np
from jax.experimental import pallas as pl
from jax.experimental.pallas import tpu as pltpu


# Model dims (PyTorch aumnist): encoder 784->128->64->12->3, decoder mirrors it.
_DIMS = (28 * 28, 128, 64, 12, 3, 12, 64, 128, 28 * 28)
_ENC_PAD = 128      # lane-pad the 3-wide bottleneck to a full 128-lane tile


# ----------------------------- Pallas kernel ------------------------------- #

def aumnist_kernel(x_ref,
                   w1, b1, w2, b2, w3, b3, w4, b4,
                   w5, b5, w6, b6, w7, b7, w8, b8,
                   enc_ref, dec_ref):
    """Whole autoencoder forward on one VMEM-resident batch tile."""

    def dense(h, w_ref, b_ref):
        # bf16 operands feed the MXU; accumulate + bias/activation epilogue in f32.
        y = jnp.dot(h.astype(jnp.bfloat16), w_ref[...],
                    preferred_element_type=jnp.float32)
        return y + b_ref[...]

    h = x_ref[...]                                   # (bm, 784) f32

    # encoder: 784 -> 128 -> 64 -> 12 -> 3 (carried lane-padded to 128)
    h = jnp.maximum(dense(h, w1, b1), 0.0)
    h = jnp.maximum(dense(h, w2, b2), 0.0)
    h = jnp.maximum(dense(h, w3, b3), 0.0)
    enc = dense(h, w4, b4)                           # (bm, 128); cols 3.. are exact zeros
    enc_ref[...] = enc.astype(enc_ref.dtype)

    # decoder: 3(->128 padded) -> 12 -> 64 -> 128 -> 784, tanh output
    h = jnp.maximum(dense(enc, w5, b5), 0.0)
    h = jnp.maximum(dense(h, w6, b6), 0.0)
    h = jnp.maximum(dense(h, w7, b7), 0.0)
    dec = jnp.tanh(dense(h, w8, b8))
    dec_ref[...] = dec.astype(dec_ref.dtype)


# ------------------------------ host wrappers ------------------------------ #

def prep_params(torch_style_params):
    """PyTorch-layout (out,in) f32 Linear params -> kernel layout.

    Weights transposed to (in,out) and cast to bf16 once at prep time; biases
    reshaped to (1,out) f32.  The 3-wide bottleneck is zero-padded to 128
    lanes (w4/b4 output columns, w5 input rows) so the enc path is lane-dense.
    Padding is exact zeros -> numerics unchanged.
    """
    prepped = []
    for li, (w, b) in enumerate(torch_style_params):
        wt = jnp.asarray(w, jnp.float32).T                     # (in, out)
        bb = jnp.asarray(b, jnp.float32).reshape(1, -1)
        if li == 3:    # Linear(12, 3): pad output dim 3 -> 128
            wt = jnp.pad(wt, ((0, 0), (0, _ENC_PAD - wt.shape[1])))
            bb = jnp.pad(bb, ((0, 0), (0, _ENC_PAD - bb.shape[1])))
        elif li == 4:  # Linear(3, 12): pad input dim 3 -> 128
            wt = jnp.pad(wt, ((0, _ENC_PAD - wt.shape[0]), (0, 0)))
        prepped.append(wt.astype(jnp.bfloat16))
        prepped.append(bb)
    return tuple(prepped)


def _round_up(x, m):
    return ((x + m - 1) // m) * m


def _pick_block_m(batch, block_m):
    bm = min(block_m, batch)
    # Guarantee >= 2 grid steps for non-tiny batches so the "parallel" batch
    # axis can shard across both v7x TensorCores.
    if batch >= 256 and pl.cdiv(batch, bm) < 2:
        bm = _round_up(pl.cdiv(batch, 2), 8)
    # Block row dim must be a multiple of 8 unless it equals the full batch.
    if bm != batch:
        bm = _round_up(bm, 8)
    return bm


def aumnist_forward(x, prepped_params, *, block_m=1024):
    """x: (B, 784) f32.  Returns (enc (B, 3) f32, dec (B, 784) f32)."""
    B, D = x.shape
    assert D == _DIMS[0]
    bm = _pick_block_m(B, block_m)
    grid = (pl.cdiv(B, bm),)

    def row_block(cols):
        return pl.BlockSpec((bm, cols), lambda i: (i, 0))

    def resident(arr):
        # Full-array block with a constant index_map: DMA'd once, stays
        # VMEM-resident across the whole batch grid.
        return pl.BlockSpec(arr.shape, lambda i: (0, 0))

    in_specs = [row_block(D)] + [resident(p) for p in prepped_params]
    out_shape = (jax.ShapeDtypeStruct((B, _ENC_PAD), jnp.float32),
                 jax.ShapeDtypeStruct((B, D), jnp.float32))
    out_specs = (row_block(_ENC_PAD), row_block(D))

    # Advisory cost estimate so XLA can schedule neighbouring ops around this call.
    flops_per_row = 2 * sum(a * b for a, b in zip(_DIMS[:-1], _DIMS[1:]))
    weight_bytes = sum(int(np.prod(p.shape)) * p.dtype.itemsize
                       for p in prepped_params)
    cost = pl.CostEstimate(
        flops=int(flops_per_row * B),
        transcendentals=int(B * D),                          # tanh epilogue
        bytes_accessed=int(B * (2 * D + _ENC_PAD) * 4 + weight_bytes))

    enc_pad, dec = pl.pallas_call(
        aumnist_kernel,
        grid=grid,
        in_specs=in_specs,
        out_specs=out_specs,
        out_shape=out_shape,
        compiler_params=pltpu.CompilerParams(
            dimension_semantics=("parallel",),
            # bm=1024 overruns v5e's 16 MiB scoped-VMEM default; 48 MiB still
            # leaves headroom under v7x's 64 MiB physical VMEM.
            vmem_limit_bytes=48 * 1024 * 1024),
        cost_estimate=cost,
    )(x, *prepped_params)

    return enc_pad[:, :_DIMS[4]], dec


def ref_forward(x, torch_style_params):
    """Pure-JAX reference with the same bf16 operand rounding as the kernel."""
    def dense(h, w, b):
        return jnp.dot(h.astype(jnp.bfloat16),
                       jnp.asarray(w, jnp.float32).T.astype(jnp.bfloat16),
                       preferred_element_type=jnp.float32) + jnp.asarray(b, jnp.float32)

    (w1, b1), (w2, b2), (w3, b3), (w4, b4), \
        (w5, b5), (w6, b6), (w7, b7), (w8, b8) = torch_style_params

    h = jnp.maximum(dense(x, w1, b1), 0.0)
    h = jnp.maximum(dense(h, w2, b2), 0.0)
    h = jnp.maximum(dense(h, w3, b3), 0.0)
    enc = dense(h, w4, b4)
    h = jnp.maximum(dense(enc, w5, b5), 0.0)
    h = jnp.maximum(dense(h, w6, b6), 0.0)
    h = jnp.maximum(dense(h, w7, b7), 0.0)
    dec = jnp.tanh(dense(h, w8, b8))
    return enc, dec


# --------------------------------- main ------------------------------------ #

if __name__ == "__main__":
    key = jax.random.PRNGKey(0)
    dims = list(_DIMS)
    keys = jax.random.split(key, 2 * (len(dims) - 1) + 2)

    # PyTorch-style Linear params: weight (out, in), bias (out,)
    params = []
    for li, (fan_in, fan_out) in enumerate(zip(dims[:-1], dims[1:])):
        kw, kb = keys[2 * li], keys[2 * li + 1]
        bound = 1.0 / float(np.sqrt(fan_in))
        w = jax.random.uniform(kw, (fan_out, fan_in),
                               minval=-bound, maxval=bound).astype(jnp.float32)
        b = jax.random.uniform(kb, (fan_out,),
                               minval=-bound, maxval=bound).astype(jnp.float32)
        params.append((w, b))

    prepped = prep_params(params)
    fwd = jax.jit(aumnist_forward)

    # batch=2: the small demo shape; batch=300: exercises the 2-step grid with
    # a ragged (masked) last batch tile.
    for bi, batch in enumerate((2, 300)):
        x = jax.random.normal(keys[16 + bi], (batch, dims[0]), dtype=jnp.float32)
        enc, dec = fwd(x, prepped)
        jax.block_until_ready((enc, dec))

        enc_r, dec_r = ref_forward(x, params)
        np.testing.assert_allclose(np.asarray(enc), np.asarray(enc_r),
                                   rtol=2e-3, atol=2e-3)
        np.testing.assert_allclose(np.asarray(dec), np.asarray(dec_r),
                                   rtol=2e-3, atol=2e-3)
        assert enc.shape == (batch, 3) and dec.shape == (batch, dims[0])
        assert enc.dtype == jnp.float32 and dec.dtype == jnp.float32

    print("KERNEL_OK")
</pallas_src>

<mosaic_0001>
module attributes {stable_mosaic.version = 11 : i64} {
  func.func @aumnist_kernel(%arg0: i32, %arg1: memref<2x784xf32, #tpu.memory_space<vmem>>, %arg2: memref<784x128xbf16, #tpu.memory_space<vmem>>, %arg3: memref<1x128xf32, #tpu.memory_space<vmem>>, %arg4: memref<128x64xbf16, #tpu.memory_space<vmem>>, %arg5: memref<1x64xf32, #tpu.memory_space<vmem>>, %arg6: memref<64x12xbf16, #tpu.memory_space<vmem>>, %arg7: memref<1x12xf32, #tpu.memory_space<vmem>>, %arg8: memref<12x128xbf16, #tpu.memory_space<vmem>>, %arg9: memref<1x128xf32, #tpu.memory_space<vmem>>, %arg10: memref<128x12xbf16, #tpu.memory_space<vmem>>, %arg11: memref<1x12xf32, #tpu.memory_space<vmem>>, %arg12: memref<12x64xbf16, #tpu.memory_space<vmem>>, %arg13: memref<1x64xf32, #tpu.memory_space<vmem>>, %arg14: memref<64x128xbf16, #tpu.memory_space<vmem>>, %arg15: memref<1x128xf32, #tpu.memory_space<vmem>>, %arg16: memref<128x784xbf16, #tpu.memory_space<vmem>>, %arg17: memref<1x784xf32, #tpu.memory_space<vmem>>, %arg18: memref<2x128xf32, #tpu.memory_space<vmem>>, %arg19: memref<2x784xf32, #tpu.memory_space<vmem>>) attributes {dimension_semantics = [#tpu.dimension_semantics<parallel>], iteration_bounds = array<i64: 1>, scalar_prefetch = 0 : i64, scratch_operands = 0 : i64, tpu.core_type = #tpu.core_type<tc>, window_params = [{transform_indices = @transform_0, window_bounds = array<i64: 2, 784>}, {pipeline_mode = #tpu.pipeline_mode<synchronous>, transform_indices = @transform_1, window_bounds = array<i64: 784, 128>}, {pipeline_mode = #tpu.pipeline_mode<synchronous>, transform_indices = @transform_2, window_bounds = array<i64: 1, 128>}, {pipeline_mode = #tpu.pipeline_mode<synchronous>, transform_indices = @transform_3, window_bounds = array<i64: 128, 64>}, {pipeline_mode = #tpu.pipeline_mode<synchronous>, transform_indices = @transform_4, window_bounds = array<i64: 1, 64>}, {pipeline_mode = #tpu.pipeline_mode<synchronous>, transform_indices = @transform_5, window_bounds = array<i64: 64, 12>}, {pipeline_mode = #tpu.pipeline_mode<synchronous>, transform_indices = @transform_6, window_bounds = array<i64: 1, 12>}, {pipeline_mode = #tpu.pipeline_mode<synchronous>, transform_indices = @transform_7, window_bounds = array<i64: 12, 128>}, {pipeline_mode = #tpu.pipeline_mode<synchronous>, transform_indices = @transform_8, window_bounds = array<i64: 1, 128>}, {pipeline_mode = #tpu.pipeline_mode<synchronous>, transform_indices = @transform_9, window_bounds = array<i64: 128, 12>}, {pipeline_mode = #tpu.pipeline_mode<synchronous>, transform_indices = @transform_10, window_bounds = array<i64: 1, 12>}, {pipeline_mode = #tpu.pipeline_mode<synchronous>, transform_indices = @transform_11, window_bounds = array<i64: 12, 64>}, {pipeline_mode = #tpu.pipeline_mode<synchronous>, transform_indices = @transform_12, window_bounds = array<i64: 1, 64>}, {pipeline_mode = #tpu.pipeline_mode<synchronous>, transform_indices = @transform_13, window_bounds = array<i64: 64, 128>}, {pipeline_mode = #tpu.pipeline_mode<synchronous>, transform_indices = @transform_14, window_bounds = array<i64: 1, 128>}, {pipeline_mode = #tpu.pipeline_mode<synchronous>, transform_indices = @transform_15, window_bounds = array<i64: 128, 784>}, {pipeline_mode = #tpu.pipeline_mode<synchronous>, transform_indices = @transform_16, window_bounds = array<i64: 1, 784>}, {transform_indices = @transform_17, window_bounds = array<i64: 2, 128>}, {transform_indices = @transform_18, window_bounds = array<i64: 2, 784>}]} {
    %c0 = arith.constant 0 : index
    %c0_0 = arith.constant 0 : index
    %0 = vector.load %arg1[%c0, %c0_0] : memref<2x784xf32, #tpu.memory_space<vmem>>, vector<2x784xf32>
    %1 = arith.truncf %0 : vector<2x784xf32> to vector<2x784xbf16>
    %c0_1 = arith.constant 0 : index
    %c0_2 = arith.constant 0 : index
    %2 = vector.load %arg2[%c0_1, %c0_2] : memref<784x128xbf16, #tpu.memory_space<vmem>>, vector<784x128xbf16>
    %cst = arith.constant dense<0.000000e+00> : vector<2x128xf32>
    %3 = tpu.matmul %1, %2, %cst {dimension_numbers = #tpu.dot_dimension_numbers<[1], [0], [0], [1], [0, 0, 1, 1], [], []>} : vector<2x784xbf16>, vector<784x128xbf16>, vector<2x128xf32> -> vector<2x128xf32>
    %c0_3 = arith.constant 0 : index
    %c0_4 = arith.constant 0 : index
    %4 = vector.load %arg3[%c0_3, %c0_4] : memref<1x128xf32, #tpu.memory_space<vmem>>, vector<1x128xf32>
    %5 = vector.broadcast %4 : vector<1x128xf32> to vector<2x128xf32>
    %6 = arith.addf %3, %5 : vector<2x128xf32>
    %cst_5 = arith.constant 0.000000e+00 : f32
    %7 = vector.broadcast %cst_5 : f32 to vector<2x128xf32>
    %8 = arith.maximumf %6, %7 : vector<2x128xf32>
    %9 = arith.truncf %8 : vector<2x128xf32> to vector<2x128xbf16>
    %c0_6 = arith.constant 0 : index
    %c0_7 = arith.constant 0 : index
    %10 = vector.load %arg4[%c0_6, %c0_7] : memref<128x64xbf16, #tpu.memory_space<vmem>>, vector<128x64xbf16>
    %cst_8 = arith.constant dense<0.000000e+00> : vector<2x64xf32>
    %11 = tpu.matmul %9, %10, %cst_8 {dimension_numbers = #tpu.dot_dimension_numbers<[1], [0], [0], [1], [0, 0, 1, 1], [], []>} : vector<2x128xbf16>, vector<128x64xbf16>, vector<2x64xf32> -> vector<2x64xf32>
    %c0_9 = arith.constant 0 : index
    %c0_10 = arith.constant 0 : index
    %12 = vector.load %arg5[%c0_9, %c0_10] : memref<1x64xf32, #tpu.memory_space<vmem>>, vector<1x64xf32>
    %13 = vector.broadcast %12 : vector<1x64xf32> to vector<2x64xf32>
    %14 = arith.addf %11, %13 : vector<2x64xf32>
    %cst_11 = arith.constant 0.000000e+00 : f32
    %15 = vector.broadcast %cst_11 : f32 to vector<2x64xf32>
    %16 = arith.maximumf %14, %15 : vector<2x64xf32>
    %17 = arith.truncf %16 : vector<2x64xf32> to vector<2x64xbf16>
    %c0_12 = arith.constant 0 : index
    %c0_13 = arith.constant 0 : index
    %18 = vector.load %arg6[%c0_12, %c0_13] : memref<64x12xbf16, #tpu.memory_space<vmem>>, vector<64x12xbf16>
    %cst_14 = arith.constant dense<0.000000e+00> : vector<2x12xf32>
    %19 = tpu.matmul %17, %18, %cst_14 {dimension_numbers = #tpu.dot_dimension_numbers<[1], [0], [0], [1], [0, 0, 1, 1], [], []>} : vector<2x64xbf16>, vector<64x12xbf16>, vector<2x12xf32> -> vector<2x12xf32>
    %c0_15 = arith.constant 0 : index
    %c0_16 = arith.constant 0 : index
    %20 = vector.load %arg7[%c0_15, %c0_16] : memref<1x12xf32, #tpu.memory_space<vmem>>, vector<1x12xf32>
    %21 = vector.broadcast %20 : vector<1x12xf32> to vector<2x12xf32>
    %22 = arith.addf %19, %21 : vector<2x12xf32>
    %cst_17 = arith.constant 0.000000e+00 : f32
    %23 = vector.broadcast %cst_17 : f32 to vector<2x12xf32>
    %24 = arith.maximumf %22, %23 : vector<2x12xf32>
    %25 = arith.truncf %24 : vector<2x12xf32> to vector<2x12xbf16>
    %c0_18 = arith.constant 0 : index
    %c0_19 = arith.constant 0 : index
    %26 = vector.load %arg8[%c0_18, %c0_19] : memref<12x128xbf16, #tpu.memory_space<vmem>>, vector<12x128xbf16>
    %cst_20 = arith.constant dense<0.000000e+00> : vector<2x128xf32>
    %27 = tpu.matmul %25, %26, %cst_20 {dimension_numbers = #tpu.dot_dimension_numbers<[1], [0], [0], [1], [0, 0, 1, 1], [], []>} : vector<2x12xbf16>, vector<12x128xbf16>, vector<2x128xf32> -> vector<2x128xf32>
    %c0_21 = arith.constant 0 : index
    %c0_22 = arith.constant 0 : index
    %28 = vector.load %arg9[%c0_21, %c0_22] : memref<1x128xf32, #tpu.memory_space<vmem>>, vector<1x128xf32>
    %29 = vector.broadcast %28 : vector<1x128xf32> to vector<2x128xf32>
    %30 = arith.addf %27, %29 : vector<2x128xf32>
    %c0_23 = arith.constant 0 : index
    %c0_24 = arith.constant 0 : index
    %31 = vector.load %arg18[%c0_23, %c0_24] : memref<2x128xf32, #tpu.memory_space<vmem>>, vector<2x128xf32>
    tpu.vector_store %arg18[%c0_23, %c0_24], %30 {strides = array<i32>} : memref<2x128xf32, #tpu.memory_space<vmem>>, vector<2x128xf32>,
    %32 = arith.truncf %30 : vector<2x128xf32> to vector<2x128xbf16>
    %c0_25 = arith.constant 0 : index
    %c0_26 = arith.constant 0 : index
    %33 = vector.load %arg10[%c0_25, %c0_26] : memref<128x12xbf16, #tpu.memory_space<vmem>>, vector<128x12xbf16>
    %cst_27 = arith.constant dense<0.000000e+00> : vector<2x12xf32>
    %34 = tpu.matmul %32, %33, %cst_27 {dimension_numbers = #tpu.dot_dimension_numbers<[1], [0], [0], [1], [0, 0, 1, 1], [], []>} : vector<2x128xbf16>, vector<128x12xbf16>, vector<2x12xf32> -> vector<2x12xf32>
    %c0_28 = arith.constant 0 : index
    %c0_29 = arith.constant 0 : index
    %35 = vector.load %arg11[%c0_28, %c0_29] : memref<1x12xf32, #tpu.memory_space<vmem>>, vector<1x12xf32>
    %36 = vector.broadcast %35 : vector<1x12xf32> to vector<2x12xf32>
    %37 = arith.addf %34, %36 : vector<2x12xf32>
    %cst_30 = arith.constant 0.000000e+00 : f32
    %38 = vector.broadcast %cst_30 : f32 to vector<2x12xf32>
    %39 = arith.maximumf %37, %38 : vector<2x12xf32>
    %40 = arith.truncf %39 : vector<2x12xf32> to vector<2x12xbf16>
    %c0_31 = arith.constant 0 : index
    %c0_32 = arith.constant 0 : index
    %41 = vector.load %arg12[%c0_31, %c0_32] : memref<12x64xbf16, #tpu.memory_space<vmem>>, vector<12x64xbf16>
    %cst_33 = arith.constant dense<0.000000e+00> : vector<2x64xf32>
    %42 = tpu.matmul %40, %41, %cst_33 {dimension_numbers = #tpu.dot_dimension_numbers<[1], [0], [0], [1], [0, 0, 1, 1], [], []>} : vector<2x12xbf16>, vector<12x64xbf16>, vector<2x64xf32> -> vector<2x64xf32>
    %c0_34 = arith.constant 0 : index
    %c0_35 = arith.constant 0 : index
    %43 = vector.load %arg13[%c0_34, %c0_35] : memref<1x64xf32, #tpu.memory_space<vmem>>, vector<1x64xf32>
    %44 = vector.broadcast %43 : vector<1x64xf32> to vector<2x64xf32>
    %45 = arith.addf %42, %44 : vector<2x64xf32>
    %cst_36 = arith.constant 0.000000e+00 : f32
    %46 = vector.broadcast %cst_36 : f32 to vector<2x64xf32>
    %47 = arith.maximumf %45, %46 : vector<2x64xf32>
    %48 = arith.truncf %47 : vector<2x64xf32> to vector<2x64xbf16>
    %c0_37 = arith.constant 0 : index
    %c0_38 = arith.constant 0 : index
    %49 = vector.load %arg14[%c0_37, %c0_38] : memref<64x128xbf16, #tpu.memory_space<vmem>>, vector<64x128xbf16>
    %cst_39 = arith.constant dense<0.000000e+00> : vector<2x128xf32>
    %50 = tpu.matmul %48, %49, %cst_39 {dimension_numbers = #tpu.dot_dimension_numbers<[1], [0], [0], [1], [0, 0, 1, 1], [], []>} : vector<2x64xbf16>, vector<64x128xbf16>, vector<2x128xf32> -> vector<2x128xf32>
    %c0_40 = arith.constant 0 : index
    %c0_41 = arith.constant 0 : index
    %51 = vector.load %arg15[%c0_40, %c0_41] : memref<1x128xf32, #tpu.memory_space<vmem>>, vector<1x128xf32>
    %52 = vector.broadcast %51 : vector<1x128xf32> to vector<2x128xf32>
    %53 = arith.addf %50, %52 : vector<2x128xf32>
    %cst_42 = arith.constant 0.000000e+00 : f32
    %54 = vector.broadcast %cst_42 : f32 to vector<2x128xf32>
    %55 = arith.maximumf %53, %54 : vector<2x128xf32>
    %56 = arith.truncf %55 : vector<2x128xf32> to vector<2x128xbf16>
    %c0_43 = arith.constant 0 : index
    %c0_44 = arith.constant 0 : index
    %57 = vector.load %arg16[%c0_43, %c0_44] : memref<128x784xbf16, #tpu.memory_space<vmem>>, vector<128x784xbf16>
    %cst_45 = arith.constant dense<0.000000e+00> : vector<2x784xf32>
    %58 = tpu.matmul %56, %57, %cst_45 {dimension_numbers = #tpu.dot_dimension_numbers<[1], [0], [0], [1], [0, 0, 1, 1], [], []>} : vector<2x128xbf16>, vector<128x784xbf16>, vector<2x784xf32> -> vector<2x784xf32>
    %c0_46 = arith.constant 0 : index
    %c0_47 = arith.constant 0 : index
    %59 = vector.load %arg17[%c0_46, %c0_47] : memref<1x784xf32, #tpu.memory_space<vmem>>, vector<1x784xf32>
    %60 = vector.broadcast %59 : vector<1x784xf32> to vector<2x784xf32>
    %61 = arith.addf %58, %60 : vector<2x784xf32>
    %62 = math.tanh %61 : vector<2x784xf32>
    %c0_48 = arith.constant 0 : index
    %c0_49 = arith.constant 0 : index
    %63 = vector.load %arg19[%c0_48, %c0_49] : memref<2x784xf32, #tpu.memory_space<vmem>>, vector<2x784xf32>
    tpu.vector_store %arg19[%c0_48, %c0_49], %62 {strides = array<i32>} : memref<2x784xf32, #tpu.memory_space<vmem>>, vector<2x784xf32>,
    return
  }
  func.func @transform_0(%arg0: i32) -> (i32, i32) {
    %c0_i32 = arith.constant 0 : i32
    %c0_i32_0 = arith.constant 0 : i32
    return %arg0, %c0_i32 : i32, i32
  }
  func.func @transform_1(%arg0: i32) -> (i32, i32) {
    %c0_i32 = arith.constant 0 : i32
    %c0_i32_0 = arith.constant 0 : i32
    %c0_i32_1 = arith.constant 0 : i32
    return %c0_i32, %c0_i32_0 : i32, i32
  }
  func.func @transform_2(%arg0: i32) -> (i32, i32) {
    %c0_i32 = arith.constant 0 : i32
    %c0_i32_0 = arith.constant 0 : i32
    %c0_i32_1 = arith.constant 0 : i32
    return %c0_i32, %c0_i32_0 : i32, i32
  }
  func.func @transform_3(%arg0: i32) -> (i32, i32) {
    %c0_i32 = arith.constant 0 : i32
    %c0_i32_0 = arith.constant 0 : i32
    %c0_i32_1 = arith.constant 0 : i32
    return %c0_i32, %c0_i32_0 : i32, i32
  }
  func.func @transform_4(%arg0: i32) -> (i32, i32) {
    %c0_i32 = arith.constant 0 : i32
    %c0_i32_0 = arith.constant 0 : i32
    %c0_i32_1 = arith.constant 0 : i32
    return %c0_i32, %c0_i32_0 : i32, i32
  }
  func.func @transform_5(%arg0: i32) -> (i32, i32) {
    %c0_i32 = arith.constant 0 : i32
    %c0_i32_0 = arith.constant 0 : i32
    %c0_i32_1 = arith.constant 0 : i32
    return %c0_i32, %c0_i32_0 : i32, i32
  }
  func.func @transform_6(%arg0: i32) -> (i32, i32) {
    %c0_i32 = arith.constant 0 : i32
    %c0_i32_0 = arith.constant 0 : i32
    %c0_i32_1 = arith.constant 0 : i32
    return %c0_i32, %c0_i32_0 : i32, i32
  }
  func.func @transform_7(%arg0: i32) -> (i32, i32) {
    %c0_i32 = arith.constant 0 : i32
    %c0_i32_0 = arith.constant 0 : i32
    %c0_i32_1 = arith.constant 0 : i32
    return %c0_i32, %c0_i32_0 : i32, i32
  }
  func.func @transform_8(%arg0: i32) -> (i32, i32) {
    %c0_i32 = arith.constant 0 : i32
    %c0_i32_0 = arith.constant 0 : i32
    %c0_i32_1 = arith.constant 0 : i32
    return %c0_i32, %c0_i32_0 : i32, i32
  }
  func.func @transform_9(%arg0: i32) -> (i32, i32) {
    %c0_i32 = arith.constant 0 : i32
    %c0_i32_0 = arith.constant 0 : i32
    %c0_i32_1 = arith.constant 0 : i32
    return %c0_i32, %c0_i32_0 : i32, i32
  }
  func.func @transform_10(%arg0: i32) -> (i32, i32) {
    %c0_i32 = arith.constant 0 : i32
    %c0_i32_0 = arith.constant 0 : i32
    %c0_i32_1 = arith.constant 0 : i32
    return %c0_i32, %c0_i32_0 : i32, i32
  }
  func.func @transform_11(%arg0: i32) -> (i32, i32) {
    %c0_i32 = arith.constant 0 : i32
    %c0_i32_0 = arith.constant 0 : i32
    %c0_i32_1 = arith.constant 0 : i32
    return %c0_i32, %c0_i32_0 : i32, i32
  }
  func.func @transform_12(%arg0: i32) -> (i32, i32) {
    %c0_i32 = arith.constant 0 : i32
    %c0_i32_0 = arith.constant 0 : i32
    %c0_i32_1 = arith.constant 0 : i32
    return %c0_i32, %c0_i32_0 : i32, i32
  }
  func.func @transform_13(%arg0: i32) -> (i32, i32) {
    %c0_i32 = arith.constant 0 : i32
    %c0_i32_0 = arith.constant 0 : i32
    %c0_i32_1 = arith.constant 0 : i32
    return %c0_i32, %c0_i32_0 : i32, i32
  }
  func.func @transform_14(%arg0: i32) -> (i32, i32) {
    %c0_i32 = arith.constant 0 : i32
    %c0_i32_0 = arith.constant 0 : i32
    %c0_i32_1 = arith.constant 0 : i32
    return %c0_i32, %c0_i32_0 : i32, i32
  }
  func.func @transform_15(%arg0: i32) -> (i32, i32) {
    %c0_i32 = arith.constant 0 : i32
    %c0_i32_0 = arith.constant 0 : i32
    %c0_i32_1 = arith.constant 0 : i32
    return %c0_i32, %c0_i32_0 : i32, i32
  }
  func.func @transform_16(%arg0: i32) -> (i32, i32) {
    %c0_i32 = arith.constant 0 : i32
    %c0_i32_0 = arith.constant 0 : i32
    %c0_i32_1 = arith.constant 0 : i32
    return %c0_i32, %c0_i32_0 : i32, i32
  }
  func.func @transform_17(%arg0: i32) -> (i32, i32) {
    %c0_i32 = arith.constant 0 : i32
    %c0_i32_0 = arith.constant 0 : i32
    return %arg0, %c0_i32 : i32, i32
  }
  func.func @transform_18(%arg0: i32) -> (i32, i32) {
    %c0_i32 = arith.constant 0 : i32
    %c0_i32_0 = arith.constant 0 : i32
    return %arg0, %c0_i32 : i32, i32
  }
}

</mosaic_0001>

<llo_original>
// kernel: aumnist_forward.1
$region0: #{aumnist_forward.1}
  #allocation0 [shape = 'u32[]', space=smem, size = 0x4, offset = 0x4, fixed_abs, tag = 'smem constant byte address 0x4 - core index']
  #allocation1 [shape = 'u32[144,128]{1,0:T(1,128)}', space=vmem, size = 0x12000, scoped, tag = 'internal scratch']
  %s0 = inlined_call_operand.vmem [shape: f32[2,784], index: 0, kind: input, shape index: {}]
  %s1 = inlined_call_operand.vmem [shape: bf16[784,128], index: 1, kind: input, shape index: {}]
  %s2 = inlined_call_operand.vmem [shape: f32[1,128], index: 2, kind: input, shape index: {}]
  %s3 = inlined_call_operand.vmem [shape: bf16[128,64], index: 3, kind: input, shape index: {}]
  %s4 = inlined_call_operand.vmem [shape: f32[1,64], index: 4, kind: input, shape index: {}]
  %s5 = inlined_call_operand.vmem [shape: bf16[64,12], index: 5, kind: input, shape index: {}]
  %s6 = inlined_call_operand.vmem [shape: f32[1,12], index: 6, kind: input, shape index: {}]
  %s7 = inlined_call_operand.vmem [shape: bf16[12,128], index: 7, kind: input, shape index: {}]
  %s8 = inlined_call_operand.vmem [shape: f32[1,128], index: 8, kind: input, shape index: {}]
  %s9 = inlined_call_operand.vmem [shape: bf16[128,12], index: 9, kind: input, shape index: {}]
  %s10 = inlined_call_operand.vmem [shape: f32[1,12], index: 10, kind: input, shape index: {}]
  %s11 = inlined_call_operand.vmem [shape: bf16[12,64], index: 11, kind: input, shape index: {}]
  %s12 = inlined_call_operand.vmem [shape: f32[1,64], index: 12, kind: input, shape index: {}]
  %s13 = inlined_call_operand.vmem [shape: bf16[64,128], index: 13, kind: input, shape index: {}]
  %s14 = inlined_call_operand.vmem [shape: f32[1,128], index: 14, kind: input, shape index: {}]
  %s15 = inlined_call_operand.vmem [shape: bf16[128,784], index: 15, kind: input, shape index: {}]
  %s16 = inlined_call_operand.vmem [shape: f32[1,784], index: 16, kind: input, shape index: {}]
  %s17 = inlined_call_operand.hbm [shape: f32[2,128], index: 17, kind: output, shape index: {0}]
  %s18 = inlined_call_operand.hbm [shape: f32[2,784], index: 18, kind: output, shape index: {1}]
  %19 = xla_tuple %s17, %s18
  %s20 = sld [smem:[#allocation0]]
  $region86: #{aumnist_forward.1} parent=0
    _
  %s22 = ssub.s32 1, %s20
  %s23 = scalar_select 0, %s22, %s20
  $region1: #{aumnist_forward.1} parent=0
    #allocation2 [shape = 'u8[1024]{0}', space=vmem, size = 0x400, scoped, tag = 'output window, operand 0, single buffered']
    #allocation3 [shape = 's32[1]{0}', space=sflag, size = 0x4, scoped, tag = 'scoped memory for aumnist_forward.1']
    #allocation4 [shape = 'u8[7168]{0}', space=vmem, size = 0x1c00, scoped, tag = 'output window, operand 1, single buffered']
    #allocation5 [shape = 's32[1]{0}', space=sflag, size = 0x4, scoped, tag = 'scoped memory for aumnist_forward.1']
    %24 = vsyncpa [#allocation3], 0
    %25 = vsyncpa [#allocation5], 0
    // Predicated region
    $region2: #{aumnist_forward.1} parent=1 // pred_check
      _
    $region3: #{aumnist_forward.1} parent=1 // pred_check_branch
      %27 = sbr.rel (0) target = $region5
    $region4: #{aumnist_forward.1} parent=1 // pred_region
      _
    $region5: #{aumnist_forward.1} parent=1 // pred_fallthru
      _
    // Predicated region
    $region6: #{aumnist_forward.1} parent=1 // pred_check
      _
    $region7: #{aumnist_forward.1} parent=1 // pred_check_branch
      %29 = sbr.rel (0) target = $region9
    $region8: #{aumnist_forward.1} parent=1 // pred_region
      _
    $region9: #{aumnist_forward.1} parent=1 // pred_fallthru
      _
    // Predicated region
    $region10: #{aumnist_forward.1} parent=1 // pred_check
      _
    $region11: #{aumnist_forward.1} parent=1 // pred_check_branch
      %31 = sbr.rel (0) target = $region13
    $region12: #{aumnist_forward.1} parent=1 // pred_region
      _
    $region13: #{aumnist_forward.1} parent=1 // pred_fallthru
      _
    // Predicated region
    $region14: #{aumnist_forward.1} parent=1 // pred_check
      _
    $region15: #{aumnist_forward.1} parent=1 // pred_check_branch
      %33 = sbr.rel (0) target = $region17
    $region16: #{aumnist_forward.1} parent=1 // pred_region
      _
    $region17: #{aumnist_forward.1} parent=1 // pred_fallthru
      _
    // Predicated region
    $region18: #{aumnist_forward.1} parent=1 // pred_check
      _
    $region19: #{aumnist_forward.1} parent=1 // pred_check_branch
      %35 = sbr.rel (0) target = $region21
    $region20: #{aumnist_forward.1} parent=1 // pred_region
      _
    $region21: #{aumnist_forward.1} parent=1 // pred_fallthru
      _
    // Predicated region
    $region22: #{aumnist_forward.1} parent=1 // pred_check
      _
    $region23: #{aumnist_forward.1} parent=1 // pred_check_branch
      %37 = sbr.rel (0) target = $region25
    $region24: #{aumnist_forward.1} parent=1 // pred_region
      _
    $region25: #{aumnist_forward.1} parent=1 // pred_fallthru
      _
    // Predicated region
    $region26: #{aumnist_forward.1} parent=1 // pred_check
      _
    $region27: #{aumnist_forward.1} parent=1 // pred_check_branch
      %39 = sbr.rel (0) target = $region29
    $region28: #{aumnist_forward.1} parent=1 // pred_region
      _
    $region29: #{aumnist_forward.1} parent=1 // pred_fallthru
      _
    // Predicated region
    $region30: #{aumnist_forward.1} parent=1 // pred_check
      _
    $region31: #{aumnist_forward.1} parent=1 // pred_check_branch
      %41 = sbr.rel (0) target = $region33
    $region32: #{aumnist_forward.1} parent=1 // pred_region
      _
    $region33: #{aumnist_forward.1} parent=1 // pred_fallthru
      _
    // Predicated region
    $region34: #{aumnist_forward.1} parent=1 // pred_check
      _
    $region35: #{aumnist_forward.1} parent=1 // pred_check_branch
      %43 = sbr.rel (0) target = $region37
    $region36: #{aumnist_forward.1} parent=1 // pred_region
      _
    $region37: #{aumnist_forward.1} parent=1 // pred_fallthru
      _
    // Predicated region
    $region38: #{aumnist_forward.1} parent=1 // pred_check
      _
    $region39: #{aumnist_forward.1} parent=1 // pred_check_branch
      %45 = sbr.rel (0) target = $region41
    $region40: #{aumnist_forward.1} parent=1 // pred_region
      _
    $region41: #{aumnist_forward.1} parent=1 // pred_fallthru
      _
    // Predicated region
    $region42: #{aumnist_forward.1} parent=1 // pred_check
      _
    $region43: #{aumnist_forward.1} parent=1 // pred_check_branch
      %47 = sbr.rel (0) target = $region45
    $region44: #{aumnist_forward.1} parent=1 // pred_region
      _
    $region45: #{aumnist_forward.1} parent=1 // pred_fallthru
      _
    // Predicated region
    $region46: #{aumnist_forward.1} parent=1 // pred_check
      _
    $region47: #{aumnist_forward.1} parent=1 // pred_check_branch
      %49 = sbr.rel (0) target = $region49
    $region48: #{aumnist_forward.1} parent=1 // pred_region
      _
    $region49: #{aumnist_forward.1} parent=1 // pred_fallthru
      _
    // Predicated region
    $region50: #{aumnist_forward.1} parent=1 // pred_check
      _
    $region51: #{aumnist_forward.1} parent=1 // pred_check_branch
      %51 = sbr.rel (0) target = $region53
    $region52: #{aumnist_forward.1} parent=1 // pred_region
      _
    $region53: #{aumnist_forward.1} parent=1 // pred_fallthru
      _
    // Predicated region
    $region54: #{aumnist_forward.1} parent=1 // pred_check
      _
    $region55: #{aumnist_forward.1} parent=1 // pred_check_branch
      %53 = sbr.rel (0) target = $region57
    $region56: #{aumnist_forward.1} parent=1 // pred_region
      _
    $region57: #{aumnist_forward.1} parent=1 // pred_fallthru
      _
    // Predicated region
    $region58: #{aumnist_forward.1} parent=1 // pred_check
      _
    $region59: #{aumnist_forward.1} parent=1 // pred_check_branch
      %55 = sbr.rel (0) target = $region61
    $region60: #{aumnist_forward.1} parent=1 // pred_region
      _
    $region61: #{aumnist_forward.1} parent=1 // pred_fallthru
      _
    // Predicated region
    $region62: #{aumnist_forward.1} parent=1 // pred_check
      _
    $region63: #{aumnist_forward.1} parent=1 // pred_check_branch
      %57 = sbr.rel (0) target = $region65
    $region64: #{aumnist_forward.1} parent=1 // pred_region
      _
    $region65: #{aumnist_forward.1} parent=1 // pred_fallthru
      _
    // Predicated region
    $region66: #{aumnist_forward.1} parent=1 // pred_check
      _
    $region67: #{aumnist_forward.1} parent=1 // pred_check_branch
      %59 = sbr.rel (0) target = $region69
    $region68: #{aumnist_forward.1} parent=1 // pred_region
      _
    $region69: #{aumnist_forward.1} parent=1 // pred_fallthru
      _
    %v61 = vld [vmem:[%s0] sm:$0xff]
    %v62 = vld [vmem:[%s0 + $0x8] sm:$0x3f]
    %v65 = vcombine.high %v61, %v61
    %v67 = vunpack.c.l.s4 1983009808
    %v68 = vunpack.c.0.s8 %v67
    %v69 = vlaneseq
    %v70 = vshrl.u32 %v69, 7
    %v71 = vsub.s32 %v68, %v70
    %v72 = vrot.slane %v61, %v71
    %v74 = vunpack.c.l.s4 1983009808
    %v75 = vunpack.c.0.s8 %v74
    %v76 = vlaneseq
    %v77 = vshrl.u32 %v76, 7
    %v78 = vsub.s32 %v75, %v77
    %v79 = vrot.slane %v65, %v78
    %v80 = vcombine.high %v72, %v72
    %v81 = vcombine.high %v79, %v79
    %v82 = vcombine.high %v62, %v62
    %v84 = vunpack.c.l.s4 1983009808
    %v85 = vunpack.c.0.s8 %v84
    %v86 = vlaneseq
    %v87 = vshrl.u32 %v86, 7
    %v88 = vsub.s32 %v85, %v87
    %v89 = vrot.slane %v62, %v88
    %v91 = vunpack.c.l.s4 1983009808
    %v92 = vunpack.c.0.s8 %v91
    %v93 = vlaneseq
    %v94 = vshrl.u32 %v93, 7
    %v95 = vsub.s32 %v92, %v94
    %v96 = vrot.slane %v82, %v95
    %v97 = vcombine.high %v89, %v89
    %v105 = vpack.c.bf16 %v72, %v72
    %v106 = vpack.c.bf16 %v80, %v80
    %v107 = vpack.c.bf16 %v79, %v79
    %v108 = vpack.c.bf16 %v81, %v81
    %v109 = vpack.c.bf16 %v89, %v89
    %v110 = vpack.c.bf16 %v97, %v97
    %v111 = vpack.c.bf16 %v96, %v96
    %v112 = vld [vmem:[%s1] sm:$0xf]
    %v113 = vld [vmem:[%s1 + $0x4] sm:$0xf]
    %v114 = vld [vmem:[%s1 + $0x8] sm:$0xf]
    %v115 = vld [vmem:[%s1 + $0xc] sm:$0xf]
    %v116 = vld [vmem:[%s1 + $0x10] sm:$0xf]
    %v117 = vld [vmem:[%s1 + $0x14] sm:$0xf]
    %v118 = vld [vmem:[%s1 + $0x18] sm:$0xf]
    %v119 = vld [vmem:[%s1 + $0x1c] sm:$0xf]
    %v120 = vld [vmem:[%s1 + $0x20] sm:$0xf]
    %v121 = vld [vmem:[%s1 + $0x24] sm:$0xf]
    %v122 = vld [vmem:[%s1 + $0x28] sm:$0xf]
    %v123 = vld [vmem:[%s1 + $0x2c] sm:$0xf]
    %v124 = vld [vmem:[%s1 + $0x30] sm:$0xf]
    %v125 = vld [vmem:[%s1 + $0x34] sm:$0xf]
    %v126 = vld [vmem:[%s1 + $0x38] sm:$0xf]
    %v127 = vld [vmem:[%s1 + $0x3c] sm:$0xf]
    %v128 = vld [vmem:[%s1 + $0x40] sm:$0xf]
    %v129 = vld [vmem:[%s1 + $0x44] sm:$0xf]
    %v130 = vld [vmem:[%s1 + $0x48] sm:$0xf]
    %v131 = vld [vmem:[%s1 + $0x4c] sm:$0xf]
    %v132 = vld [vmem:[%s1 + $0x50] sm:$0xf]
    %v133 = vld [vmem:[%s1 + $0x54] sm:$0xf]
    %v134 = vld [vmem:[%s1 + $0x58] sm:$0xf]
    %v135 = vld [vmem:[%s1 + $0x5c] sm:$0xf]
    %v136 = vld [vmem:[%s1 + $0x60] sm:$0xf]
    %v137 = vld [vmem:[%s1 + $0x64] sm:$0xf]
    %v138 = vld [vmem:[%s1 + $0x68] sm:$0xf]
    %v139 = vld [vmem:[%s1 + $0x6c] sm:$0xf]
    %v140 = vld [vmem:[%s1 + $0x70] sm:$0xf]
    %v141 = vld [vmem:[%s1 + $0x74] sm:$0xf]
    %v142 = vld [vmem:[%s1 + $0x78] sm:$0xf]
    %v143 = vld [vmem:[%s1 + $0x7c] sm:$0xf]
    %v144 = vld [vmem:[%s1 + $0x80] sm:$0xf]
    %v145 = vld [vmem:[%s1 + $0x84] sm:$0xf]
    %v146 = vld [vmem:[%s1 + $0x88] sm:$0xf]
    %v147 = vld [vmem:[%s1 + $0x8c] sm:$0xf]
    %v148 = vld [vmem:[%s1 + $0x90] sm:$0xf]
    %v149 = vld [vmem:[%s1 + $0x94] sm:$0xf]
    %v150 = vld [vmem:[%s1 + $0x98] sm:$0xf]
    %v151 = vld [vmem:[%s1 + $0x9c] sm:$0xf]
    %v152 = vld [vmem:[%s1 + $0xa0] sm:$0xf]
    %v153 = vld [vmem:[%s1 + $0xa4] sm:$0xf]
    %v154 = vld [vmem:[%s1 + $0xa8] sm:$0xf]
    %v155 = vld [vmem:[%s1 + $0xac] sm:$0xf]
    %v156 = vld [vmem:[%s1 + $0xb0] sm:$0xf]
    %v157 = vld [vmem:[%s1 + $0xb4] sm:$0xf]
    %v158 = vld [vmem:[%s1 + $0xb8] sm:$0xf]
    %v159 = vld [vmem:[%s1 + $0xbc] sm:$0xf]
    %v160 = vld [vmem:[%s1 + $0xc0] sm:$0xf]
    %v161 = vld [vmem:[%s1 + $0xc4] sm:$0xf]
    %v162 = vld [vmem:[%s1 + $0xc8] sm:$0xf]
    %v163 = vld [vmem:[%s1 + $0xcc] sm:$0xf]
    %v164 = vld [vmem:[%s1 + $0xd0] sm:$0xf]
    %v165 = vld [vmem:[%s1 + $0xd4] sm:$0xf]
    %v166 = vld [vmem:[%s1 + $0xd8] sm:$0xf]
    %v167 = vld [vmem:[%s1 + $0xdc] sm:$0xf]
    %v168 = vld [vmem:[%s1 + $0xe0] sm:$0xf]
    %v169 = vld [vmem:[%s1 + $0xe4] sm:$0xf]
    %v170 = vld [vmem:[%s1 + $0xe8] sm:$0xf]
    %v171 = vld [vmem:[%s1 + $0xec] sm:$0xf]
    %v172 = vld [vmem:[%s1 + $0xf0] sm:$0xf]
    %v173 = vld [vmem:[%s1 + $0xf4] sm:$0xf]
    %v174 = vld [vmem:[%s1 + $0xf8] sm:$0xf]
    %v175 = vld [vmem:[%s1 + $0xfc] sm:$0xf]
    %v176 = vld [vmem:[%s1 + $0x100] sm:$0xf]
    %v177 = vld [vmem:[%s1 + $0x104] sm:$0xf]
    %v178 = vld [vmem:[%s1 + $0x108] sm:$0xf]
    %v179 = vld [vmem:[%s1 + $0x10c] sm:$0xf]
    %v180 = vld [vmem:[%s1 + $0x110] sm:$0xf]
    %v181 = vld [vmem:[%s1 + $0x114] sm:$0xf]
    %v182 = vld [vmem:[%s1 + $0x118] sm:$0xf]
    %v183 = vld [vmem:[%s1 + $0x11c] sm:$0xf]
    %v184 = vld [vmem:[%s1 + $0x120] sm:$0xf]
    %v185 = vld [vmem:[%s1 + $0x124] sm:$0xf]
    %v186 = vld [vmem:[%s1 + $0x128] sm:$0xf]
    %v187 = vld [vmem:[%s1 + $0x12c] sm:$0xf]
    %v188 = vld [vmem:[%s1 + $0x130] sm:$0xf]
    %v189 = vld [vmem:[%s1 + $0x134] sm:$0xf]
    %v190 = vld [vmem:[%s1 + $0x138] sm:$0xf]
    %v191 = vld [vmem:[%s1 + $0x13c] sm:$0xf]
    %v192 = vld [vmem:[%s1 + $0x140] sm:$0xf]
    %v193 = vld [vmem:[%s1 + $0x144] sm:$0xf]
    %v194 = vld [vmem:[%s1 + $0x148] sm:$0xf]
    %v195 = vld [vmem:[%s1 + $0x14c] sm:$0xf]
    %v196 = vld [vmem:[%s1 + $0x150] sm:$0xf]
    %v197 = vld [vmem:[%s1 + $0x154] sm:$0xf]
    %v198 = vld [vmem:[%s1 + $0x158] sm:$0xf]
    %v199 = vld [vmem:[%s1 + $0x15c] sm:$0xf]
    %v200 = vld [vmem:[%s1 + $0x160] sm:$0xf]
    %v201 = vld [vmem:[%s1 + $0x164] sm:$0xf]
    %v202 = vld [vmem:[%s1 + $0x168] sm:$0xf]
    %v203 = vld [vmem:[%s1 + $0x16c] sm:$0xf]
    %v204 = vld [vmem:[%s1 + $0x170] sm:$0xf]
    %v205 = vld [vmem:[%s1 + $0x174] sm:$0xf]
    %v206 = vld [vmem:[%s1 + $0x178] sm:$0xf]
    %v207 = vld [vmem:[%s1 + $0x17c] sm:$0xf]
    %v208 = vld [vmem:[%s1 + $0x180] sm:$0xf]
    %v209 = vld [vmem:[%s1 + $0x184] sm:$0xf]
    %v210 = vld [vmem:[%s2] sm:$0x1]
    %v212 = vlaneseq
    %v213 = vshrl.u32 %v212, 7
    %v214 = vsub.s32 0, %v213
    %v215 = vrot.slane %v210, %v214
    %v315 = vunpack.c.l.b16 %v112
    %v316 = vunpack.c.l.b16 %v113
    %v317 = vunpack.c.l.b16 %v114
    %v318 = vunpack.c.l.b16 %v115
    %v319 = vunpack.c.l.b16 %v116
    %v320 = vunpack.c.l.b16 %v117
    %v321 = vunpack.c.l.b16 %v118
    %v322 = vunpack.c.l.b16 %v119
    %v323 = vunpack.c.l.b16 %v120
    %v324 = vunpack.c.l.b16 %v121
    %v325 = vunpack.c.l.b16 %v122
    %v326 = vunpack.c.l.b16 %v123
    %v327 = vunpack.c.l.b16 %v124
    %v328 = vunpack.c.l.b16 %v125
    %v329 = vunpack.c.l.b16 %v126
    %v330 = vunpack.c.l.b16 %v127
    %v331 = vunpack.c.l.b16 %v128
    %v332 = vunpack.c.l.b16 %v129
    %v333 = vunpack.c.l.b16 %v130
    %v334 = vunpack.c.l.b16 %v131
    %v335 = vunpack.c.l.b16 %v132
    %v336 = vunpack.c.l.b16 %v133
    %v337 = vunpack.c.l.b16 %v134
    %v338 = vunpack.c.l.b16 %v135
    %v339 = vunpack.c.l.b16 %v136
    %v340 = vunpack.c.l.b16 %v137
    %v341 = vunpack.c.l.b16 %v138
    %v342 = vunpack.c.l.b16 %v139
    %v343 = vunpack.c.l.b16 %v140
    %v344 = vunpack.c.l.b16 %v141
    %v345 = vunpack.c.l.b16 %v142
    %v346 = vunpack.c.l.b16 %v143
    %v347 = vunpack.c.l.b16 %v144
    %v348 = vunpack.c.l.b16 %v145
    %v349 = vunpack.c.l.b16 %v146
    %v350 = vunpack.c.l.b16 %v147
    %v351 = vunpack.c.l.b16 %v148
    %v352 = vunpack.c.l.b16 %v149
    %v353 = vunpack.c.l.b16 %v150
    %v354 = vunpack.c.l.b16 %v151
    %v355 = vunpack.c.l.b16 %v152
    %v356 = vunpack.c.l.b16 %v153
    %v357 = vunpack.c.l.b16 %v154
    %v358 = vunpack.c.l.b16 %v155
    %v359 = vunpack.c.l.b16 %v156
    %v360 = vunpack.c.l.b16 %v157
    %v361 = vunpack.c.l.b16 %v158
    %v362 = vunpack.c.l.b16 %v159
    %v363 = vunpack.c.l.b16 %v160
    %v364 = vunpack.c.l.b16 %v161
    %v365 = vunpack.c.l.b16 %v162
    %v366 = vunpack.c.l.b16 %v163
    %v367 = vunpack.c.l.b16 %v164
    %v368 = vunpack.c.l.b16 %v165
    %v369 = vunpack.c.l.b16 %v166
    %v370 = vunpack.c.l.b16 %v167
    %v371 = vunpack.c.l.b16 %v168
    %v372 = vunpack.c.l.b16 %v169
    %v373 = vunpack.c.l.b16 %v170
    %v374 = vunpack.c.l.b16 %v171
    %v375 = vunpack.c.l.b16 %v172
    %v376 = vunpack.c.l.b16 %v173
    %v377 = vunpack.c.l.b16 %v174
    %v378 = vunpack.c.l.b16 %v175
    %v379 = vunpack.c.l.b16 %v176
    %v380 = vunpack.c.l.b16 %v177
    %v381 = vunpack.c.l.b16 %v178
    %v382 = vunpack.c.l.b16 %v179
    %v383 = vunpack.c.l.b16 %v180
    %v384 = vunpack.c.l.b16 %v181
    %v385 = vunpack.c.l.b16 %v182
    %v386 = vunpack.c.l.b16 %v183
    %v387 = vunpack.c.l.b16 %v184
    %v388 = vunpack.c.l.b16 %v185
    %v389 = vunpack.c.l.b16 %v186
    %v390 = vunpack.c.l.b16 %v187
    %v391 = vunpack.c.l.b16 %v188
    %v392 = vunpack.c.l.b16 %v189
    %v393 = vunpack.c.l.b16 %v190
    %v394 = vunpack.c.l.b16 %v191
    %v395 = vunpack.c.l.b16 %v192
    %v396 = vunpack.c.l.b16 %v193
    %v397 = vunpack.c.l.b16 %v194
    %v398 = vunpack.c.l.b16 %v195
    %v399 = vunpack.c.l.b16 %v196
    %v400 = vunpack.c.l.b16 %v197
    %v401 = vunpack.c.l.b16 %v198
    %v402 = vunpack.c.l.b16 %v199
    %v403 = vunpack.c.l.b16 %v200
    %v404 = vunpack.c.l.b16 %v201
    %v405 = vunpack.c.l.b16 %v202
    %v406 = vunpack.c.l.b16 %v203
    %v407 = vunpack.c.l.b16 %v204
    %v408 = vunpack.c.l.b16 %v205
    %v409 = vunpack.c.l.b16 %v206
    %v410 = vunpack.c.l.b16 %v207
    %v411 = vunpack.c.l.b16 %v208
    %v412 = vunpack.c.l.b16 %v209
    %v413 = vpack.c.b16 %v316, %v315
    %v414 = vpack.c.b16 %v318, %v317
    %v415 = vpack.c.b16 %v320, %v319
    %v416 = vpack.c.b16 %v322, %v321
    %v417 = vpack.c.b16 %v324, %v323
    %v418 = vpack.c.b16 %v326, %v325
    %v419 = vpack.c.b16 %v328, %v327
    %v420 = vpack.c.b16 %v330, %v329
    %v421 = vpack.c.b16 %v332, %v331
    %v422 = vpack.c.b16 %v334, %v333
    %v423 = vpack.c.b16 %v336, %v335
    %v424 = vpack.c.b16 %v338, %v337
    %v425 = vpack.c.b16 %v340, %v339
    %v426 = vpack.c.b16 %v342, %v341
    %v427 = vpack.c.b16 %v344, %v343
    %v428 = vpack.c.b16 %v346, %v345
    %v429 = vpack.c.b16 %v348, %v347
    %v430 = vpack.c.b16 %v350, %v349
    %v431 = vpack.c.b16 %v352, %v351
    %v432 = vpack.c.b16 %v354, %v353
    %v433 = vpack.c.b16 %v356, %v355
    %v434 = vpack.c.b16 %v358, %v357
    %v435 = vpack.c.b16 %v360, %v359
    %v436 = vpack.c.b16 %v362, %v361
    %v437 = vpack.c.b16 %v364, %v363
    %v438 = vpack.c.b16 %v366, %v365
    %v439 = vpack.c.b16 %v368, %v367
    %v440 = vpack.c.b16 %v370, %v369
    %v441 = vpack.c.b16 %v372, %v371
    %v442 = vpack.c.b16 %v374, %v373
    %v443 = vpack.c.b16 %v376, %v375
    %v444 = vpack.c.b16 %v378, %v377
    %v445 = vpack.c.b16 %v380, %v379
    %v446 = vpack.c.b16 %v382, %v381
    %v447 = vpack.c.b16 %v384, %v383
    %v448 = vpack.c.b16 %v386, %v385
    %v449 = vpack.c.b16 %v388, %v387
    %v450 = vpack.c.b16 %v390, %v389
    %v451 = vpack.c.b16 %v392, %v391
    %v452 = vpack.c.b16 %v394, %v393
    %v453 = vpack.c.b16 %v396, %v395
    %v454 = vpack.c.b16 %v398, %v397
    %v455 = vpack.c.b16 %v400, %v399
    %v456 = vpack.c.b16 %v402, %v401
    %v457 = vpack.c.b16 %v404, %v403
    %v458 = vpack.c.b16 %v406, %v405
    %v459 = vpack.c.b16 %v408, %v407
    %v460 = vpack.c.b16 %v410, %v409
    %v461 = vpack.c.b16 %v412, %v411
    %vm511 = vcmask 130048
    %v513 = vsel %vm511, %v111, 0
    %515 = vmatprep.subr.bf16.mxu0 0
    %516 = vmatpush1.bf16.msra.mxu0 %v420
    %517 = vmatprep.subr.bf16.mxu0 0
    %518 = vmatpush1.bf16.msra.mxu0 %v419
    %519 = vmatprep.subr.bf16.mxu0 0
    %520 = vmatpush1.bf16.msra.mxu0 %v418
    %521 = vmatprep.subr.bf16.mxu0 0
    %522 = vmatpush1.bf16.msra.mxu0 %v417
    %523 = vmatprep.subr.bf16.mxu0 0
    %524 = vmatpush1.bf16.msra.mxu0 %v416
    %525 = vmatprep.subr.bf16.mxu0 0
    %526 = vmatpush1.bf16.msra.mxu0 %v415
    %527 = vmatprep.subr.bf16.mxu0 0
    %528 = vmatpush1.bf16.msra.mxu0 %v414
    %529 = vmatprep.subr.bf16.mxu0 0
    %530 = vmatpush1.bf16.msra.mxu0 %v413
    %531 = vmatprep.subr.bf16.mxu0 0
    %532 = vmatpush2.bf16.msra.mxu0 %v428
    %533 = vmatprep.subr.bf16.mxu0 0
    %534 = vmatpush2.bf16.msra.mxu0 %v427
    %535 = vmatprep.subr.bf16.mxu0 0
    %536 = vmatpush2.bf16.msra.mxu0 %v426
    %537 = vmatprep.subr.bf16.mxu0 0
    %538 = vmatpush2.bf16.msra.mxu0 %v425
    %539 = vmatprep.subr.bf16.mxu0 0
    %540 = vmatpush2.bf16.msra.mxu0 %v424
    %541 = vmatprep.subr.bf16.mxu0 0
    %542 = vmatpush2.bf16.msra.mxu0 %v423
    %543 = vmatprep.subr.bf16.mxu0 0
    %544 = vmatpush2.bf16.msra.mxu0 %v422
    %545 = vmatprep.subr.bf16.mxu0 0
    %546 = vmatpush2.bf16.msra.mxu0 %v421
    %547 = vmatprep.mubr.bf16.mxu0 %v106
    %548 = vmatmul.mubr.bf16.gmra.mxu0 %v105
    %v549 = vpop.f32.mrf.mxu0
    %v550 = vadd.f32 %v215, %v549
    %v551 = vpop.f32.mrf.mxu0
    %v552 = vpop.f32.mrf.mxu0
    %v553 = vpop.f32.mrf.mxu0
    %554 = vdwg.mxu0
    %555 = vmatprep.subr.bf16.mxu0 0
    %556 = vmatpush1.bf16.msra.mxu0 %v436
    %557 = vmatprep.subr.bf16.mxu0 0
    %558 = vmatpush1.bf16.msra.mxu0 %v435
    %559 = vmatprep.subr.bf16.mxu0 0
    %560 = vmatpush1.bf16.msra.mxu0 %v434
    %561 = vmatprep.subr.bf16.mxu0 0
    %562 = vmatpush1.bf16.msra.mxu0 %v433
    %563 = vmatprep.subr.bf16.mxu0 0
    %564 = vmatpush1.bf16.msra.mxu0 %v432
    %565 = vmatprep.subr.bf16.mxu0 0
    %566 = vmatpush1.bf16.msra.mxu0 %v431
    %567 = vmatprep.subr.bf16.mxu0 0
    %568 = vmatpush1.bf16.msra.mxu0 %v430
    %569 = vmatprep.subr.bf16.mxu0 0
    %570 = vmatpush1.bf16.msra.mxu0 %v429
    %571 = vmatprep.subr.bf16.mxu0 0
    %572 = vmatpush2.bf16.msra.mxu0 %v444
    %573 = vmatprep.subr.bf16.mxu0 0
    %574 = vmatpush2.bf16.msra.mxu0 %v443
    %575 = vmatprep.subr.bf16.mxu0 0
    %576 = vmatpush2.bf16.msra.mxu0 %v442
    %577 = vmatprep.subr.bf16.mxu0 0
    %578 = vmatpush2.bf16.msra.mxu0 %v441
    %579 = vmatprep.subr.bf16.mxu0 0
    %580 = vmatpush2.bf16.msra.mxu0 %v440
    %581 = vmatprep.subr.bf16.mxu0 0
    %582 = vmatpush2.bf16.msra.mxu0 %v439
    %583 = vmatprep.subr.bf16.mxu0 0
    %584 = vmatpush2.bf16.msra.mxu0 %v438
    %585 = vmatprep.subr.bf16.mxu0 0
    %586 = vmatpush2.bf16.msra.mxu0 %v437
    %587 = vmatprep.mubr.bf16.mxu0 %v108
    %588 = vmatmul.mubr.bf16.gmra.mxu0 %v107
    %v589 = vpop.f32.mrf.mxu0
    %v590 = vadd.f32 %v550, %v589
    %v591 = vpop.f32.mrf.mxu0
    %v592 = vpop.f32.mrf.mxu0
    %v593 = vpop.f32.mrf.mxu0
    %594 = vdwg.mxu0
    %595 = vmatprep.subr.bf16.mxu0 0
    %596 = vmatpush1.bf16.msra.mxu0 %v452
    %597 = vmatprep.subr.bf16.mxu0 0
    %598 = vmatpush1.bf16.msra.mxu0 %v451
    %599 = vmatprep.subr.bf16.mxu0 0
    %600 = vmatpush1.bf16.msra.mxu0 %v450
    %601 = vmatprep.subr.bf16.mxu0 0
    %602 = vmatpush1.bf16.msra.mxu0 %v449
    %603 = vmatprep.subr.bf16.mxu0 0
    %604 = vmatpush1.bf16.msra.mxu0 %v448
    %605 = vmatprep.subr.bf16.mxu0 0
    %606 = vmatpush1.bf16.msra.mxu0 %v447
    %607 = vmatprep.subr.bf16.mxu0 0
    %608 = vmatpush1.bf16.msra.mxu0 %v446
    %609 = vmatprep.subr.bf16.mxu0 0
    %610 = vmatpush1.bf16.msra.mxu0 %v445
    %611 = vmatprep.subr.bf16.mxu0 0
    %612 = vmatpush2.bf16.msra.mxu0 %v460
    %613 = vmatprep.subr.bf16.mxu0 0
    %614 = vmatpush2.bf16.msra.mxu0 %v459
    %615 = vmatprep.subr.bf16.mxu0 0
    %616 = vmatpush2.bf16.msra.mxu0 %v458
    %617 = vmatprep.subr.bf16.mxu0 0
    %618 = vmatpush2.bf16.msra.mxu0 %v457
    %619 = vmatprep.subr.bf16.mxu0 0
    %620 = vmatpush2.bf16.msra.mxu0 %v456
    %621 = vmatprep.subr.bf16.mxu0 0
    %622 = vmatpush2.bf16.msra.mxu0 %v455
    %623 = vmatprep.subr.bf16.mxu0 0
    %624 = vmatpush2.bf16.msra.mxu0 %v454
    %625 = vmatprep.subr.bf16.mxu0 0
    %626 = vmatpush2.bf16.msra.mxu0 %v453
    %627 = vmatprep.mubr.bf16.mxu0 %v110
    %628 = vmatmul.mubr.bf16.gmra.mxu0 %v109
    %v629 = vpop.f32.mrf.mxu0
    %v630 = vadd.f32 %v590, %v629
    %v631 = vpop.f32.mrf.mxu0
    %v632 = vpop.f32.mrf.mxu0
    %v633 = vpop.f32.mrf.mxu0
    %634 = vdwg.mxu0
    %635 = vmatprep.subr.bf16.mxu0 0
    %636 = vmatpush1.bf16.msra.mxu0 0
    %637 = vmatprep.subr.bf16.mxu0 0
    %638 = vmatpush1.bf16.msra.mxu0 0
    %639 = vmatprep.subr.bf16.mxu0 0
    %640 = vmatpush1.bf16.msra.mxu0 0
    %641 = vmatprep.subr.bf16.mxu0 0
    %642 = vmatpush1.bf16.msra.mxu0 0
    %643 = vmatprep.subr.bf16.mxu0 0
    %644 = vmatpush1.bf16.msra.mxu0 0
    %645 = vmatprep.subr.bf16.mxu0 0
    %646 = vmatpush1.bf16.msra.mxu0 0
    %647 = vmatprep.subr.bf16.mxu0 0
    %648 = vmatpush1.bf16.msra.mxu0 0
    %649 = vmatprep.subr.bf16.mxu0 0
    %650 = vmatpush1.bf16.msra.mxu0 %v461
    %651 = vmatprep.subr.bf16.mxu0 0
    %652 = vmatpush2.bf16.msra.mxu0 0
    %653 = vmatprep.subr.bf16.mxu0 0
    %654 = vmatpush2.bf16.msra.mxu0 0
    %655 = vmatprep.subr.bf16.mxu0 0
    %656 = vmatpush2.bf16.msra.mxu0 0
    %657 = vmatprep.subr.bf16.mxu0 0
    %658 = vmatpush2.bf16.msra.mxu0 0
    %659 = vmatprep.subr.bf16.mxu0 0
    %660 = vmatpush2.bf16.msra.mxu0 0
    %661 = vmatprep.subr.bf16.mxu0 0
    %662 = vmatpush2.bf16.msra.mxu0 0
    %663 = vmatprep.subr.bf16.mxu0 0
    %664 = vmatpush2.bf16.msra.mxu0 0
    %665 = vmatprep.subr.bf16.mxu0 0
    %666 = vmatpush2.bf16.msra.mxu0 0
    %667 = vmatprep.mubr.bf16.mxu0 0
    %668 = vmatmul.mubr.bf16.gmra.mxu0 %v513
    %v669 = vpop.f32.mrf.mxu0
    %v670 = vadd.f32 %v630, %v669
    %v671 = vpop.f32.mrf.mxu0
    %v672 = vpop.f32.mrf.mxu0
    %v673 = vpop.f32.mrf.mxu0
    %674 = vdwg.mxu0
    %v675 = vmax.f32 %v670, 0.0
    %v676 = vpack.c.bf16 %v675, %v675
    %v677 = vld [vmem:[%s3] sm:$0xf]
    %v678 = vld [vmem:[%s3 + $0x4] sm:$0xf]
    %v679 = vld [vmem:[%s3 + $0x8] sm:$0xf]
    %v680 = vld [vmem:[%s3 + $0xc] sm:$0xf]
    %v681 = vld [vmem:[%s3 + $0x10] sm:$0xf]
    %v682 = vld [vmem:[%s3 + $0x14] sm:$0xf]
    %v683 = vld [vmem:[%s3 + $0x18] sm:$0xf]
    %v684 = vld [vmem:[%s3 + $0x1c] sm:$0xf]
    %v685 = vld [vmem:[%s3 + $0x20] sm:$0xf]
    %v686 = vld [vmem:[%s3 + $0x24] sm:$0xf]
    %v687 = vld [vmem:[%s3 + $0x28] sm:$0xf]
    %v688 = vld [vmem:[%s3 + $0x2c] sm:$0xf]
    %v689 = vld [vmem:[%s3 + $0x30] sm:$0xf]
    %v690 = vld [vmem:[%s3 + $0x34] sm:$0xf]
    %v691 = vld [vmem:[%s3 + $0x38] sm:$0xf]
    %v692 = vld [vmem:[%s3 + $0x3c] sm:$0xf]
    %v693 = vld [vmem:[%s4] sm:$0x1]
    %v695 = vlaneseq
    %v696 = vshrl.u32 %v695, 7
    %v697 = vsub.s32 0, %v696
    %v698 = vrot.slane %v693, %v697
    %v716 = vunpack.c.l.b16 %v677
    %v717 = vunpack.c.l.b16 %v678
    %v718 = vunpack.c.l.b16 %v679
    %v719 = vunpack.c.l.b16 %v680
    %v720 = vunpack.c.l.b16 %v681
    %v721 = vunpack.c.l.b16 %v682
    %v722 = vunpack.c.l.b16 %v683
    %v723 = vunpack.c.l.b16 %v684
    %v724 = vunpack.c.l.b16 %v685
    %v725 = vunpack.c.l.b16 %v686
    %v726 = vunpack.c.l.b16 %v687
    %v727 = vunpack.c.l.b16 %v688
    %v728 = vunpack.c.l.b16 %v689
    %v729 = vunpack.c.l.b16 %v690
    %v730 = vunpack.c.l.b16 %v691
    %v731 = vunpack.c.l.b16 %v692
    %v732 = vpack.c.b16 %v717, %v716
    %v733 = vpack.c.b16 %v719, %v718
    %v734 = vpack.c.b16 %v721, %v720
    %v735 = vpack.c.b16 %v723, %v722
    %v736 = vpack.c.b16 %v725, %v724
    %v737 = vpack.c.b16 %v727, %v726
    %v738 = vpack.c.b16 %v729, %v728
    %v739 = vpack.c.b16 %v731, %v730
    %748 = vmatprep.subr.bf16.mxu0 0
    %749 = vmatpush1.bf16.msra.mxu0 %v739
    %750 = vmatprep.subr.bf16.mxu0 0
    %751 = vmatpush1.bf16.msra.mxu0 %v738
    %752 = vmatprep.subr.bf16.mxu0 0
    %753 = vmatpush1.bf16.msra.mxu0 %v737
    %754 = vmatprep.subr.bf16.mxu0 0
    %755 = vmatpush1.bf16.msra.mxu0 %v736
    %756 = vmatprep.subr.bf16.mxu0 0
    %757 = vmatpush1.bf16.msra.mxu0 %v735
    %758 = vmatprep.subr.bf16.mxu0 0
    %759 = vmatpush1.bf16.msra.mxu0 %v734
    %760 = vmatprep.subr.bf16.mxu0 0
    %761 = vmatpush1.bf16.msra.mxu0 %v733
    %762 = vmatprep.subr.bf16.mxu0 0
    %763 = vmatpush1.bf16.msra.mxu0 %v732
    %764 = vmatprep.subr.bf16.mxu0 0
    %765 = vmatpush2.bf16.msra.mxu0 0
    %766 = vmatprep.subr.bf16.mxu0 0
    %767 = vmatpush2.bf16.msra.mxu0 0
    %768 = vmatprep.subr.bf16.mxu0 0
    %769 = vmatpush2.bf16.msra.mxu0 0
    %770 = vmatprep.subr.bf16.mxu0 0
    %771 = vmatpush2.bf16.msra.mxu0 0
    %772 = vmatprep.subr.bf16.mxu0 0
    %773 = vmatpush2.bf16.msra.mxu0 0
    %774 = vmatprep.subr.bf16.mxu0 0
    %775 = vmatpush2.bf16.msra.mxu0 0
    %776 = vmatprep.subr.bf16.mxu0 0
    %777 = vmatpush2.bf16.msra.mxu0 0
    %778 = vmatprep.subr.bf16.mxu0 0
    %779 = vmatpush2.bf16.msra.mxu0 0
    %780 = vmatprep.mubr.bf16.mxu0 0
    %781 = vmatmul.mubr.bf16.gmra.mxu0 %v676
    %v782 = vpop.f32.mrf.mxu0
    %v783 = vadd.f32 %v698, %v782
    %v784 = vpop.f32.mrf.mxu0
    %v785 = vpop.f32.mrf.mxu0
    %v786 = vpop.f32.mrf.mxu0
    %787 = vdwg.mxu0
    %v788 = vmax.f32 %v783, 0.0
    %v789 = vpack.c.bf16 %v788, %v788
    %v790 = vld [vmem:[%s5] sm:$0xf]
    %v791 = vld [vmem:[%s5 + $0x4] sm:$0xf]
    %v792 = vld [vmem:[%s5 + $0x8] sm:$0xf]
    %v793 = vld [vmem:[%s5 + $0xc] sm:$0xf]
    %v794 = vld [vmem:[%s5 + $0x10] sm:$0xf]
    %v795 = vld [vmem:[%s5 + $0x14] sm:$0xf]
    %v796 = vld [vmem:[%s5 + $0x18] sm:$0xf]
    %v797 = vld [vmem:[%s5 + $0x1c] sm:$0xf]
    %v798 = vld [vmem:[%s6] sm:$0x1]
    %v800 = vlaneseq
    %v801 = vshrl.u32 %v800, 7
    %v802 = vsub.s32 0, %v801
    %v803 = vrot.slane %v798, %v802
    %v813 = vunpack.c.l.b16 %v790
    %v814 = vunpack.c.l.b16 %v791
    %v815 = vunpack.c.l.b16 %v792
    %v816 = vunpack.c.l.b16 %v793
    %v817 = vunpack.c.l.b16 %v794
    %v818 = vunpack.c.l.b16 %v795
    %v819 = vunpack.c.l.b16 %v796
    %v820 = vunpack.c.l.b16 %v797
    %v821 = vpack.c.b16 %v814, %v813
    %v822 = vpack.c.b16 %v816, %v815
    %v823 = vpack.c.b16 %v818, %v817
    %v824 = vpack.c.b16 %v820, %v819
    %vm829 = vcmask 523264
    %v831 = vsel %vm829, %v789, 0
    %833 = vmatprep.subr.bf16.mxu0 0
    %834 = vmatpush1.bf16.msra.mxu0 0
    %835 = vmatprep.subr.bf16.mxu0 0
    %836 = vmatpush1.bf16.msra.mxu0 0
    %837 = vmatprep.subr.bf16.mxu0 0
    %838 = vmatpush1.bf16.msra.mxu0 0
    %839 = vmatprep.subr.bf16.mxu0 0
    %840 = vmatpush1.bf16.msra.mxu0 0
    %841 = vmatprep.subr.bf16.mxu0 0
    %842 = vmatpush1.bf16.msra.mxu0 %v824
    %843 = vmatprep.subr.bf16.mxu0 0
    %844 = vmatpush1.bf16.msra.mxu0 %v823
    %845 = vmatprep.subr.bf16.mxu0 0
    %846 = vmatpush1.bf16.msra.mxu0 %v822
    %847 = vmatprep.subr.bf16.mxu0 0
    %848 = vmatpush1.bf16.msra.mxu0 %v821
    %849 = vmatprep.subr.bf16.mxu0 0
    %850 = vmatpush2.bf16.msra.mxu0 0
    %851 = vmatprep.subr.bf16.mxu0 0
    %852 = vmatpush2.bf16.msra.mxu0 0
    %853 = vmatprep.subr.bf16.mxu0 0
    %854 = vmatpush2.bf16.msra.mxu0 0
    %855 = vmatprep.subr.bf16.mxu0 0
    %856 = vmatpush2.bf16.msra.mxu0 0
    %857 = vmatprep.subr.bf16.mxu0 0
    %858 = vmatpush2.bf16.msra.mxu0 0
    %859 = vmatprep.subr.bf16.mxu0 0
    %860 = vmatpush2.bf16.msra.mxu0 0
    %861 = vmatprep.subr.bf16.mxu0 0
    %862 = vmatpush2.bf16.msra.mxu0 0
    %863 = vmatprep.subr.bf16.mxu0 0
    %864 = vmatpush2.bf16.msra.mxu0 0
    %865 = vmatprep.mubr.bf16.mxu0 0
    %866 = vmatmul.mubr.bf16.gmra.mxu0 %v831
    %v867 = vpop.f32.mrf.mxu0
    %v868 = vadd.f32 %v803, %v867
    %v869 = vpop.f32.mrf.mxu0
    %v870 = vpop.f32.mrf.mxu0
    %v871 = vpop.f32.mrf.mxu0
    %872 = vdwg.mxu0
    %v873 = vmax.f32 %v868, 0.0
    %v874 = vpack.c.bf16 %v873, %v873
    %v875 = vld [vmem:[%s7] sm:$0xf]
    %v876 = vld [vmem:[%s7 + $0x4] sm:$0x3]
    %v877 = vld [vmem:[%s8] sm:$0x1]
    %v879 = vlaneseq
    %v880 = vshrl.u32 %v879, 7
    %v881 = vsub.s32 0, %v880
    %v882 = vrot.slane %v877, %v881
    %v886 = vunpack.c.l.b16 %v875
    %v887 = vunpack.c.l.b16 %v876
    %v888 = vpack.c.b16 %v887, %v886
    %vm889 = vcmask 97280
    %v891 = vsel %vm889, %v874, 0
    %vm893 = vcmask 1045504
    %v895 = vsel %vm893, %v888, 0
    %897 = vmatprep.subr.bf16.mxu0 0
    %898 = vmatpush1.bf16.msra.mxu0 0
    %899 = vmatprep.subr.bf16.mxu0 0
    %900 = vmatpush1.bf16.msra.mxu0 0
    %901 = vmatprep.subr.bf16.mxu0 0
    %902 = vmatpush1.bf16.msra.mxu0 0
    %903 = vmatprep.subr.bf16.mxu0 0
    %904 = vmatpush1.bf16.msra.mxu0 0
    %905 = vmatprep.subr.bf16.mxu0 0
    %906 = vmatpush1.bf16.msra.mxu0 0
    %907 = vmatprep.subr.bf16.mxu0 0
    %908 = vmatpush1.bf16.msra.mxu0 0
    %909 = vmatprep.subr.bf16.mxu0 0
    %910 = vmatpush1.bf16.msra.mxu0 0
    %911 = vmatprep.subr.bf16.mxu0 0
    %912 = vmatpush1.bf16.msra.mxu0 %v895
    %913 = vmatprep.subr.bf16.mxu0 0
    %914 = vmatpush2.bf16.msra.mxu0 0
    %915 = vmatprep.subr.bf16.mxu0 0
    %916 = vmatpush2.bf16.msra.mxu0 0
    %917 = vmatprep.subr.bf16.mxu0 0
    %918 = vmatpush2.bf16.msra.mxu0 0
    %919 = vmatprep.subr.bf16.mxu0 0
    %920 = vmatpush2.bf16.msra.mxu0 0
    %921 = vmatprep.subr.bf16.mxu0 0
    %922 = vmatpush2.bf16.msra.mxu0 0
    %923 = vmatprep.subr.bf16.mxu0 0
    %924 = vmatpush2.bf16.msra.mxu0 0
    %925 = vmatprep.subr.bf16.mxu0 0
    %926 = vmatpush2.bf16.msra.mxu0 0
    %927 = vmatprep.subr.bf16.mxu0 0
    %928 = vmatpush2.bf16.msra.mxu0 0
    %929 = vmatprep.mubr.bf16.mxu0 0
    %930 = vmatmul.mubr.bf16.gmra.mxu0 %v891
    %v931 = vpop.f32.mrf.mxu0
    %v932 = vadd.f32 %v882, %v931
    %v933 = vpop.f32.mrf.mxu0
    %v934 = vpop.f32.mrf.mxu0
    %v935 = vpop.f32.mrf.mxu0
    %936 = vdwg.mxu0
    %937 = vst [vmem:[#allocation2] sm:$0x3] %v932
    %v938 = vpack.c.bf16 %v932, %v932
    %v939 = vld [vmem:[%s9] sm:$0xf]
    %v940 = vld [vmem:[%s9 + $0x4] sm:$0xf]
    %v941 = vld [vmem:[%s9 + $0x8] sm:$0xf]
    %v942 = vld [vmem:[%s9 + $0xc] sm:$0xf]
    %v943 = vld [vmem:[%s9 + $0x10] sm:$0xf]
    %v944 = vld [vmem:[%s9 + $0x14] sm:$0xf]
    %v945 = vld [vmem:[%s9 + $0x18] sm:$0xf]
    %v946 = vld [vmem:[%s9 + $0x1c] sm:$0xf]
    %v947 = vld [vmem:[%s9 + $0x20] sm:$0xf]
    %v948 = vld [vmem:[%s9 + $0x24] sm:$0xf]
    %v949 = vld [vmem:[%s9 + $0x28] sm:$0xf]
    %v950 = vld [vmem:[%s9 + $0x2c] sm:$0xf]
    %v951 = vld [vmem:[%s9 + $0x30] sm:$0xf]
    %v952 = vld [vmem:[%s9 + $0x34] sm:$0xf]
    %v953 = vld [vmem:[%s9 + $0x38] sm:$0xf]
    %v954 = vld [vmem:[%s9 + $0x3c] sm:$0xf]
    %v955 = vld [vmem:[%s10] sm:$0x1]
    %v957 = vlaneseq
    %v958 = vshrl.u32 %v957, 7
    %v959 = vsub.s32 0, %v958
    %v960 = vrot.slane %v955, %v959
    %v978 = vunpack.c.l.b16 %v939
    %v979 = vunpack.c.l.b16 %v940
    %v980 = vunpack.c.l.b16 %v941
    %v981 = vunpack.c.l.b16 %v942
    %v982 = vunpack.c.l.b16 %v943
    %v983 = vunpack.c.l.b16 %v944
    %v984 = vunpack.c.l.b16 %v945
    %v985 = vunpack.c.l.b16 %v946
    %v986 = vunpack.c.l.b16 %v947
    %v987 = vunpack.c.l.b16 %v948
    %v988 = vunpack.c.l.b16 %v949
    %v989 = vunpack.c.l.b16 %v950
    %v990 = vunpack.c.l.b16 %v951
    %v991 = vunpack.c.l.b16 %v952
    %v992 = vunpack.c.l.b16 %v953
    %v993 = vunpack.c.l.b16 %v954
    %v994 = vpack.c.b16 %v979, %v978
    %v995 = vpack.c.b16 %v981, %v980
    %v996 = vpack.c.b16 %v983, %v982
    %v997 = vpack.c.b16 %v985, %v984
    %v998 = vpack.c.b16 %v987, %v986
    %v999 = vpack.c.b16 %v989, %v988
    %v1000 = vpack.c.b16 %v991, %v990
    %v1001 = vpack.c.b16 %v993, %v992
    %1010 = vmatprep.subr.bf16.mxu0 0
    %1011 = vmatpush1.bf16.msra.mxu0 %v1001
    %1012 = vmatprep.subr.bf16.mxu0 0
    %1013 = vmatpush1.bf16.msra.mxu0 %v1000
    %1014 = vmatprep.subr.bf16.mxu0 0
    %1015 = vmatpush1.bf16.msra.mxu0 %v999
    %1016 = vmatprep.subr.bf16.mxu0 0
    %1017 = vmatpush1.bf16.msra.mxu0 %v998
    %1018 = vmatprep.subr.bf16.mxu0 0
    %1019 = vmatpush1.bf16.msra.mxu0 %v997
    %1020 = vmatprep.subr.bf16.mxu0 0
    %1021 = vmatpush1.bf16.msra.mxu0 %v996
    %1022 = vmatprep.subr.bf16.mxu0 0
    %1023 = vmatpush1.bf16.msra.mxu0 %v995
    %1024 = vmatprep.subr.bf16.mxu0 0
    %1025 = vmatpush1.bf16.msra.mxu0 %v994
    %1026 = vmatprep.subr.bf16.mxu0 0
    %1027 = vmatpush2.bf16.msra.mxu0 0
    %1028 = vmatprep.subr.bf16.mxu0 0
    %1029 = vmatpush2.bf16.msra.mxu0 0
    %1030 = vmatprep.subr.bf16.mxu0 0
    %1031 = vmatpush2.bf16.msra.mxu0 0
    %1032 = vmatprep.subr.bf16.mxu0 0
    %1033 = vmatpush2.bf16.msra.mxu0 0
    %1034 = vmatprep.subr.bf16.mxu0 0
    %1035 = vmatpush2.bf16.msra.mxu0 0
    %1036 = vmatprep.subr.bf16.mxu0 0
    %1037 = vmatpush2.bf16.msra.mxu0 0
    %1038 = vmatprep.subr.bf16.mxu0 0
    %1039 = vmatpush2.bf16.msra.mxu0 0
    %1040 = vmatprep.subr.bf16.mxu0 0
    %1041 = vmatpush2.bf16.msra.mxu0 0
    %1042 = vmatprep.mubr.bf16.mxu0 0
    %1043 = vmatmul.mubr.bf16.gmra.mxu0 %v938
    %v1044 = vpop.f32.mrf.mxu0
    %v1045 = vadd.f32 %v960, %v1044
    %v1046 = vpop.f32.mrf.mxu0
    %v1047 = vpop.f32.mrf.mxu0
    %v1048 = vpop.f32.mrf.mxu0
    %1049 = vdwg.mxu0
    %v1050 = vmax.f32 %v1045, 0.0
    %v1051 = vpack.c.bf16 %v1050, %v1050
    %v1052 = vld [vmem:[%s11] sm:$0xf]
    %v1053 = vld [vmem:[%s11 + $0x4] sm:$0x3]
    %v1054 = vld [vmem:[%s12] sm:$0x1]
    %v1056 = vlaneseq
    %v1057 = vshrl.u32 %v1056, 7
    %v1058 = vsub.s32 0, %v1057
    %v1059 = vrot.slane %v1054, %v1058
    %v1063 = vunpack.c.l.b16 %v1052
    %v1064 = vunpack.c.l.b16 %v1053
    %v1065 = vpack.c.b16 %v1064, %v1063
    %v1067 = vsel %vm889, %v1051, 0
    %v1070 = vsel %vm893, %v1065, 0
    %1072 = vmatprep.subr.bf16.mxu0 0
    %1073 = vmatpush1.bf16.msra.mxu0 0
    %1074 = vmatprep.subr.bf16.mxu0 0
    %1075 = vmatpush1.bf16.msra.mxu0 0
    %1076 = vmatprep.subr.bf16.mxu0 0
    %1077 = vmatpush1.bf16.msra.mxu0 0
    %1078 = vmatprep.subr.bf16.mxu0 0
    %1079 = vmatpush1.bf16.msra.mxu0 0
    %1080 = vmatprep.subr.bf16.mxu0 0
    %1081 = vmatpush1.bf16.msra.mxu0 0
    %1082 = vmatprep.subr.bf16.mxu0 0
    %1083 = vmatpush1.bf16.msra.mxu0 0
    %1084 = vmatprep.subr.bf16.mxu0 0
    %1085 = vmatpush1.bf16.msra.mxu0 0
    %1086 = vmatprep.subr.bf16.mxu0 0
    %1087 = vmatpush1.bf16.msra.mxu0 %v1070
    %1088 = vmatprep.subr.bf16.mxu0 0
    %1089 = vmatpush2.bf16.msra.mxu0 0
    %1090 = vmatprep.subr.bf16.mxu0 0
    %1091 = vmatpush2.bf16.msra.mxu0 0
    %1092 = vmatprep.subr.bf16.mxu0 0
    %1093 = vmatpush2.bf16.msra.mxu0 0
    %1094 = vmatprep.subr.bf16.mxu0 0
    %1095 = vmatpush2.bf16.msra.mxu0 0
    %1096 = vmatprep.subr.bf16.mxu0 0
    %1097 = vmatpush2.bf16.msra.mxu0 0
    %1098 = vmatprep.subr.bf16.mxu0 0
    %1099 = vmatpush2.bf16.msra.mxu0 0
    %1100 = vmatprep.subr.bf16.mxu0 0
    %1101 = vmatpush2.bf16.msra.mxu0 0
    %1102 = vmatprep.subr.bf16.mxu0 0
    %1103 = vmatpush2.bf16.msra.mxu0 0
    %1104 = vmatprep.mubr.bf16.mxu0 0
    %1105 = vmatmul.mubr.bf16.gmra.mxu0 %v1067
    %v1106 = vpop.f32.mrf.mxu0
    %v1107 = vadd.f32 %v1059, %v1106
    %v1108 = vpop.f32.mrf.mxu0
    %v1109 = vpop.f32.mrf.mxu0
    %v1110 = vpop.f32.mrf.mxu0
    %1111 = vdwg.mxu0
    %v1112 = vmax.f32 %v1107, 0.0
    %v1113 = vpack.c.bf16 %v1112, %v1112
    %v1114 = vld [vmem:[%s13] sm:$0xf]
    %v1115 = vld [vmem:[%s13 + $0x4] sm:$0xf]
    %v1116 = vld [vmem:[%s13 + $0x8] sm:$0xf]
    %v1117 = vld [vmem:[%s13 + $0xc] sm:$0xf]
    %v1118 = vld [vmem:[%s13 + $0x10] sm:$0xf]
    %v1119 = vld [vmem:[%s13 + $0x14] sm:$0xf]
    %v1120 = vld [vmem:[%s13 + $0x18] sm:$0xf]
    %v1121 = vld [vmem:[%s13 + $0x1c] sm:$0xf]
    %v1122 = vld [vmem:[%s14] sm:$0x1]
    %v1124 = vlaneseq
    %v1125 = vshrl.u32 %v1124, 7
    %v1126 = vsub.s32 0, %v1125
    %v1127 = vrot.slane %v1122, %v1126
    %v1137 = vunpack.c.l.b16 %v1114
    %v1138 = vunpack.c.l.b16 %v1115
    %v1139 = vunpack.c.l.b16 %v1116
    %v1140 = vunpack.c.l.b16 %v1117
    %v1141 = vunpack.c.l.b16 %v1118
    %v1142 = vunpack.c.l.b16 %v1119
    %v1143 = vunpack.c.l.b16 %v1120
    %v1144 = vunpack.c.l.b16 %v1121
    %v1145 = vpack.c.b16 %v1138, %v1137
    %v1146 = vpack.c.b16 %v1140, %v1139
    %v1147 = vpack.c.b16 %v1142, %v1141
    %v1148 = vpack.c.b16 %v1144, %v1143
    %v1154 = vsel %vm829, %v1113, 0
    %1156 = vmatprep.subr.bf16.mxu0 0
    %1157 = vmatpush1.bf16.msra.mxu0 0
    %1158 = vmatprep.subr.bf16.mxu0 0
    %1159 = vmatpush1.bf16.msra.mxu0 0
    %1160 = vmatprep.subr.bf16.mxu0 0
    %1161 = vmatpush1.bf16.msra.mxu0 0
    %1162 = vmatprep.subr.bf16.mxu0 0
    %1163 = vmatpush1.bf16.msra.mxu0 0
    %1164 = vmatprep.subr.bf16.mxu0 0
    %1165 = vmatpush1.bf16.msra.mxu0 %v1148
    %1166 = vmatprep.subr.bf16.mxu0 0
    %1167 = vmatpush1.bf16.msra.mxu0 %v1147
    %1168 = vmatprep.subr.bf16.mxu0 0
    %1169 = vmatpush1.bf16.msra.mxu0 %v1146
    %1170 = vmatprep.subr.bf16.mxu0 0
    %1171 = vmatpush1.bf16.msra.mxu0 %v1145
    %1172 = vmatprep.subr.bf16.mxu0 0
    %1173 = vmatpush2.bf16.msra.mxu0 0
    %1174 = vmatprep.subr.bf16.mxu0 0
    %1175 = vmatpush2.bf16.msra.mxu0 0
    %1176 = vmatprep.subr.bf16.mxu0 0
    %1177 = vmatpush2.bf16.msra.mxu0 0
    %1178 = vmatprep.subr.bf16.mxu0 0
    %1179 = vmatpush2.bf16.msra.mxu0 0
    %1180 = vmatprep.subr.bf16.mxu0 0
    %1181 = vmatpush2.bf16.msra.mxu0 0
    %1182 = vmatprep.subr.bf16.mxu0 0
    %1183 = vmatpush2.bf16.msra.mxu0 0
    %1184 = vmatprep.subr.bf16.mxu0 0
    %1185 = vmatpush2.bf16.msra.mxu0 0
    %1186 = vmatprep.subr.bf16.mxu0 0
    %1187 = vmatpush2.bf16.msra.mxu0 0
    %1188 = vmatprep.mubr.bf16.mxu0 0
    %1189 = vmatmul.mubr.bf16.gmra.mxu0 %v1154
    %v1190 = vpop.f32.mrf.mxu0
    %v1191 = vadd.f32 %v1127, %v1190
    %v1192 = vpop.f32.mrf.mxu0
    %v1193 = vpop.f32.mrf.mxu0
    %v1194 = vpop.f32.mrf.mxu0
    %1195 = vdwg.mxu0
    %v1196 = vmax.f32 %v1191, 0.0
    %v1197 = vpack.c.bf16 %v1196, %v1196
    %v1198 = vld [vmem:[%s15] sm:$0xff]
    %v1199 = vld [vmem:[%s15 + $0x8] sm:$0xff]
    %v1200 = vld [vmem:[%s15 + $0x10] sm:$0xff]
    %v1201 = vld [vmem:[%s15 + $0x18] sm:$0xf]
    %v1202 = vld [vmem:[%s15 + $0x1c] sm:$0xff]
    %v1203 = vld [vmem:[%s15 + $0x24] sm:$0xff]
    %v1204 = vld [vmem:[%s15 + $0x2c] sm:$0xff]
    %v1205 = vld [vmem:[%s15 + $0x34] sm:$0xf]
    %v1206 = vld [vmem:[%s15 + $0x38] sm:$0xff]
    %v1207 = vld [vmem:[%s15 + $0x40] sm:$0xff]
    %v1208 = vld [vmem:[%s15 + $0x48] sm:$0xff]
    %v1209 = vld [vmem:[%s15 + $0x50] sm:$0xf]
    %v1210 = vld [vmem:[%s15 + $0x54] sm:$0xff]
    %v1211 = vld [vmem:[%s15 + $0x5c] sm:$0xff]
    %v1212 = vld [vmem:[%s15 + $0x64] sm:$0xff]
    %v1213 = vld [vmem:[%s15 + $0x6c] sm:$0xf]
    %v1214 = vld [vmem:[%s15 + $0x70] sm:$0xff]
    %v1215 = vld [vmem:[%s15 + $0x78] sm:$0xff]
    %v1216 = vld [vmem:[%s15 + $0x80] sm:$0xff]
    %v1217 = vld [vmem:[%s15 + $0x88] sm:$0xf]
    %v1218 = vld [vmem:[%s15 + $0x8c] sm:$0xff]
    %v1219 = vld [vmem:[%s15 + $0x94] sm:$0xff]
    %v1220 = vld [vmem:[%s15 + $0x9c] sm:$0xff]
    %v1221 = vld [vmem:[%s15 + $0xa4] sm:$0xf]
    %v1222 = vld [vmem:[%s15 + $0xa8] sm:$0xff]
    %v1223 = vld [vmem:[%s15 + $0xb0] sm:$0xff]
    %v1224 = vld [vmem:[%s15 + $0xb8] sm:$0xff]
    %v1225 = vld [vmem:[%s15 + $0xc0] sm:$0xf]
    %v1226 = vld [vmem:[%s15 + $0xc4] sm:$0xff]
    %v1227 = vld [vmem:[%s15 + $0xcc] sm:$0xff]
    %v1228 = vld [vmem:[%s15 + $0xd4] sm:$0xff]
    %v1229 = vld [vmem:[%s15 + $0xdc] sm:$0xf]
    %v1230 = vld [vmem:[%s15 + $0xe0] sm:$0xff]
    %v1231 = vld [vmem:[%s15 + $0xe8] sm:$0xff]
    %v1232 = vld [vmem:[%s15 + $0xf0] sm:$0xff]
    %v1233 = vld [vmem:[%s15 + $0xf8] sm:$0xf]
    %v1234 = vld [vmem:[%s15 + $0xfc] sm:$0xff]
    %v1235 = vld [vmem:[%s15 + $0x104] sm:$0xff]
    %v1236 = vld [vmem:[%s15 + $0x10c] sm:$0xff]
    %v1237 = vld [vmem:[%s15 + $0x114] sm:$0xf]
    %v1238 = vld [vmem:[%s15 + $0x118] sm:$0xff]
    %v1239 = vld [vmem:[%s15 + $0x120] sm:$0xff]
    %v1240 = vld [vmem:[%s15 + $0x128] sm:$0xff]
    %v1241 = vld [vmem:[%s15 + $0x130] sm:$0xf]
    %v1242 = vld [vmem:[%s15 + $0x134] sm:$0xff]
    %v1243 = vld [vmem:[%s15 + $0x13c] sm:$0xff]
    %v1244 = vld [vmem:[%s15 + $0x144] sm:$0xff]
    %v1245 = vld [vmem:[%s15 + $0x14c] sm:$0xf]
    %v1246 = vld [vmem:[%s15 + $0x150] sm:$0xff]
    %v1247 = vld [vmem:[%s15 + $0x158] sm:$0xff]
    %v1248 = vld [vmem:[%s15 + $0x160] sm:$0xff]
    %v1249 = vld [vmem:[%s15 + $0x168] sm:$0xf]
    %v1250 = vld [vmem:[%s15 + $0x16c] sm:$0xff]
    %v1251 = vld [vmem:[%s15 + $0x174] sm:$0xff]
    %v1252 = vld [vmem:[%s15 + $0x17c] sm:$0xff]
    %v1253 = vld [vmem:[%s15 + $0x184] sm:$0xf]
    %v1254 = vld [vmem:[%s15 + $0x188] sm:$0xff]
    %v1255 = vld [vmem:[%s15 + $0x190] sm:$0xff]
    %v1256 = vld [vmem:[%s15 + $0x198] sm:$0xff]
    %v1257 = vld [vmem:[%s15 + $0x1a0] sm:$0xf]
    %v1258 = vld [vmem:[%s15 + $0x1a4] sm:$0xff]
    %v1259 = vld [vmem:[%s15 + $0x1ac] sm:$0xff]
    %v1260 = vld [vmem:[%s15 + $0x1b4] sm:$0xff]
    %v1261 = vld [vmem:[%s15 + $0x1bc] sm:$0xf]
    %v1262 = vld [vmem:[%s16] sm:$0x7f]
    %v1264 = vlaneseq
    %v1265 = vshrl.u32 %v1264, 7
    %v1266 = vsub.s32 0, %v1265
    %v1267 = vrot.slane %v1262, %v1266
    %v1268 = vlaneseq
    %v1269 = vshrl.u32 %v1268, 7
    %v1270 = vsub.s32 1, %v1269
    %v1271 = vrot.slane %v1262, %v1270
    %v1272 = vlaneseq
    %v1273 = vshrl.u32 %v1272, 7
    %v1274 = vsub.s32 2, %v1273
    %v1275 = vrot.slane %v1262, %v1274
    %v1276 = vlaneseq
    %v1277 = vshrl.u32 %v1276, 7
    %v1278 = vsub.s32 3, %v1277
    %v1279 = vrot.slane %v1262, %v1278
    %v1280 = vlaneseq
    %v1281 = vshrl.u32 %v1280, 7
    %v1282 = vsub.s32 4, %v1281
    %v1283 = vrot.slane %v1262, %v1282
    %v1284 = vlaneseq
    %v1285 = vshrl.u32 %v1284, 7
    %v1286 = vsub.s32 5, %v1285
    %v1287 = vrot.slane %v1262, %v1286
    %v1288 = vlaneseq
    %v1289 = vshrl.u32 %v1288, 7
    %v1290 = vsub.s32 6, %v1289
    %v1291 = vrot.slane %v1262, %v1290
    %v1363 = vunpack.c.l.b16 %v1198
    %v1364 = vunpack.c.h.b16 %v1198
    %v1365 = vunpack.c.l.b16 %v1199
    %v1366 = vunpack.c.h.b16 %v1199
    %v1367 = vunpack.c.l.b16 %v1200
    %v1368 = vunpack.c.h.b16 %v1200
    %v1369 = vunpack.c.l.b16 %v1201
    %v1370 = vunpack.c.l.b16 %v1202
    %v1371 = vunpack.c.h.b16 %v1202
    %v1372 = vunpack.c.l.b16 %v1203
    %v1373 = vunpack.c.h.b16 %v1203
    %v1374 = vunpack.c.l.b16 %v1204
    %v1375 = vunpack.c.h.b16 %v1204
    %v1376 = vunpack.c.l.b16 %v1205
    %v1377 = vunpack.c.l.b16 %v1206
    %v1378 = vunpack.c.h.b16 %v1206
    %v1379 = vunpack.c.l.b16 %v1207
    %v1380 = vunpack.c.h.b16 %v1207
    %v1381 = vunpack.c.l.b16 %v1208
    %v1382 = vunpack.c.h.b16 %v1208
    %v1383 = vunpack.c.l.b16 %v1209
    %v1384 = vunpack.c.l.b16 %v1210
    %v1385 = vunpack.c.h.b16 %v1210
    %v1386 = vunpack.c.l.b16 %v1211
    %v1387 = vunpack.c.h.b16 %v1211
    %v1388 = vunpack.c.l.b16 %v1212
    %v1389 = vunpack.c.h.b16 %v1212
    %v1390 = vunpack.c.l.b16 %v1213
    %v1391 = vunpack.c.l.b16 %v1214
    %v1392 = vunpack.c.h.b16 %v1214
    %v1393 = vunpack.c.l.b16 %v1215
    %v1394 = vunpack.c.h.b16 %v1215
    %v1395 = vunpack.c.l.b16 %v1216
    %v1396 = vunpack.c.h.b16 %v1216
    %v1397 = vunpack.c.l.b16 %v1217
    %v1398 = vunpack.c.l.b16 %v1218
    %v1399 = vunpack.c.h.b16 %v1218
    %v1400 = vunpack.c.l.b16 %v1219
    %v1401 = vunpack.c.h.b16 %v1219
    %v1402 = vunpack.c.l.b16 %v1220
    %v1403 = vunpack.c.h.b16 %v1220
    %v1404 = vunpack.c.l.b16 %v1221
    %v1405 = vunpack.c.l.b16 %v1222
    %v1406 = vunpack.c.h.b16 %v1222
    %v1407 = vunpack.c.l.b16 %v1223
    %v1408 = vunpack.c.h.b16 %v1223
    %v1409 = vunpack.c.l.b16 %v1224
    %v1410 = vunpack.c.h.b16 %v1224
    %v1411 = vunpack.c.l.b16 %v1225
    %v1412 = vunpack.c.l.b16 %v1226
    %v1413 = vunpack.c.h.b16 %v1226
    %v1414 = vunpack.c.l.b16 %v1227
    %v1415 = vunpack.c.h.b16 %v1227
    %v1416 = vunpack.c.l.b16 %v1228
    %v1417 = vunpack.c.h.b16 %v1228
    %v1418 = vunpack.c.l.b16 %v1229
    %v1419 = vunpack.c.l.b16 %v1230
    %v1420 = vunpack.c.h.b16 %v1230
    %v1421 = vunpack.c.l.b16 %v1231
    %v1422 = vunpack.c.h.b16 %v1231
    %v1423 = vunpack.c.l.b16 %v1232
    %v1424 = vunpack.c.h.b16 %v1232
    %v1425 = vunpack.c.l.b16 %v1233
    %v1426 = vunpack.c.l.b16 %v1234
    %v1427 = vunpack.c.h.b16 %v1234
    %v1428 = vunpack.c.l.b16 %v1235
    %v1429 = vunpack.c.h.b16 %v1235
    %v1430 = vunpack.c.l.b16 %v1236
    %v1431 = vunpack.c.h.b16 %v1236
    %v1432 = vunpack.c.l.b16 %v1237
    %v1433 = vunpack.c.l.b16 %v1238
    %v1434 = vunpack.c.h.b16 %v1238
    %v1435 = vunpack.c.l.b16 %v1239
    %v1436 = vunpack.c.h.b16 %v1239
    %v1437 = vunpack.c.l.b16 %v1240
    %v1438 = vunpack.c.h.b16 %v1240
    %v1439 = vunpack.c.l.b16 %v1241
    %v1440 = vunpack.c.l.b16 %v1242
    %v1441 = vunpack.c.h.b16 %v1242
    %v1442 = vunpack.c.l.b16 %v1243
    %v1443 = vunpack.c.h.b16 %v1243
    %v1444 = vunpack.c.l.b16 %v1244
    %v1445 = vunpack.c.h.b16 %v1244
    %v1446 = vunpack.c.l.b16 %v1245
    %v1447 = vunpack.c.l.b16 %v1246
    %v1448 = vunpack.c.h.b16 %v1246
    %v1449 = vunpack.c.l.b16 %v1247
    %v1450 = vunpack.c.h.b16 %v1247
    %v1451 = vunpack.c.l.b16 %v1248
    %v1452 = vunpack.c.h.b16 %v1248
    %v1453 = vunpack.c.l.b16 %v1249
    %v1454 = vunpack.c.l.b16 %v1250
    %v1455 = vunpack.c.h.b16 %v1250
    %v1456 = vunpack.c.l.b16 %v1251
    %v1457 = vunpack.c.h.b16 %v1251
    %v1458 = vunpack.c.l.b16 %v1252
    %v1459 = vunpack.c.h.b16 %v1252
    %v1460 = vunpack.c.l.b16 %v1253
    %v1461 = vunpack.c.l.b16 %v1254
    %v1462 = vunpack.c.h.b16 %v1254
    %v1463 = vunpack.c.l.b16 %v1255
    %v1464 = vunpack.c.h.b16 %v1255
    %v1465 = vunpack.c.l.b16 %v1256
    %v1466 = vunpack.c.h.b16 %v1256
    %v1467 = vunpack.c.l.b16 %v1257
    %v1468 = vunpack.c.l.b16 %v1258
    %v1469 = vunpack.c.h.b16 %v1258
    %v1470 = vunpack.c.l.b16 %v1259
    %v1471 = vunpack.c.h.b16 %v1259
    %v1472 = vunpack.c.l.b16 %v1260
    %v1473 = vunpack.c.h.b16 %v1260
    %v1474 = vunpack.c.l.b16 %v1261
    %v1475 = vpack.c.b16 %v1370, %v1363
    %v1476 = vpack.c.b16 %v1371, %v1364
    %v1477 = vpack.c.b16 %v1372, %v1365
    %v1478 = vpack.c.b16 %v1373, %v1366
    %v1479 = vpack.c.b16 %v1374, %v1367
    %v1480 = vpack.c.b16 %v1375, %v1368
    %v1481 = vpack.c.b16 %v1376, %v1369
    %v1482 = vpack.c.b16 %v1384, %v1377
    %v1483 = vpack.c.b16 %v1385, %v1378
    %v1484 = vpack.c.b16 %v1386, %v1379
    %v1485 = vpack.c.b16 %v1387, %v1380
    %v1486 = vpack.c.b16 %v1388, %v1381
    %v1487 = vpack.c.b16 %v1389, %v1382
    %v1488 = vpack.c.b16 %v1390, %v1383
    %v1489 = vpack.c.b16 %v1398, %v1391
    %v1490 = vpack.c.b16 %v1399, %v1392
    %v1491 = vpack.c.b16 %v1400, %v1393
    %v1492 = vpack.c.b16 %v1401, %v1394
    %v1493 = vpack.c.b16 %v1402, %v1395
    %v1494 = vpack.c.b16 %v1403, %v1396
    %v1495 = vpack.c.b16 %v1404, %v1397
    %v1496 = vpack.c.b16 %v1412, %v1405
    %v1497 = vpack.c.b16 %v1413, %v1406
    %v1498 = vpack.c.b16 %v1414, %v1407
    %v1499 = vpack.c.b16 %v1415, %v1408
    %v1500 = vpack.c.b16 %v1416, %v1409
    %v1501 = vpack.c.b16 %v1417, %v1410
    %v1502 = vpack.c.b16 %v1418, %v1411
    %v1503 = vpack.c.b16 %v1426, %v1419
    %v1504 = vpack.c.b16 %v1427, %v1420
    %v1505 = vpack.c.b16 %v1428, %v1421
    %v1506 = vpack.c.b16 %v1429, %v1422
    %v1507 = vpack.c.b16 %v1430, %v1423
    %v1508 = vpack.c.b16 %v1431, %v1424
    %v1509 = vpack.c.b16 %v1432, %v1425
    %v1510 = vpack.c.b16 %v1440, %v1433
    %v1511 = vpack.c.b16 %v1441, %v1434
    %v1512 = vpack.c.b16 %v1442, %v1435
    %v1513 = vpack.c.b16 %v1443, %v1436
    %v1514 = vpack.c.b16 %v1444, %v1437
    %v1515 = vpack.c.b16 %v1445, %v1438
    %v1516 = vpack.c.b16 %v1446, %v1439
    %v1517 = vpack.c.b16 %v1454, %v1447
    %v1518 = vpack.c.b16 %v1455, %v1448
    %v1519 = vpack.c.b16 %v1456, %v1449
    %v1520 = vpack.c.b16 %v1457, %v1450
    %v1521 = vpack.c.b16 %v1458, %v1451
    %v1522 = vpack.c.b16 %v1459, %v1452
    %v1523 = vpack.c.b16 %v1460, %v1453
    %v1524 = vpack.c.b16 %v1468, %v1461
    %v1525 = vpack.c.b16 %v1469, %v1462
    %v1526 = vpack.c.b16 %v1470, %v1463
    %v1527 = vpack.c.b16 %v1471, %v1464
    %v1528 = vpack.c.b16 %v1472, %v1465
    %v1529 = vpack.c.b16 %v1473, %v1466
    %v1530 = vpack.c.b16 %v1474, %v1467
    %1587 = vmatprep.subr.bf16.mxu0 %v1525
    %1588 = vmatpush1.bf16.msra.mxu0 %v1524
    %1589 = vmatprep.subr.bf16.mxu0 %v1518
    %1590 = vmatpush1.bf16.msra.mxu0 %v1517
    %1591 = vmatprep.subr.bf16.mxu0 %v1511
    %1592 = vmatpush1.bf16.msra.mxu0 %v1510
    %1593 = vmatprep.subr.bf16.mxu0 %v1504
    %1594 = vmatpush1.bf16.msra.mxu0 %v1503
    %1595 = vmatprep.subr.bf16.mxu0 %v1497
    %1596 = vmatpush1.bf16.msra.mxu0 %v1496
    %1597 = vmatprep.subr.bf16.mxu0 %v1490
    %1598 = vmatpush1.bf16.msra.mxu0 %v1489
    %1599 = vmatprep.subr.bf16.mxu0 %v1483
    %1600 = vmatpush1.bf16.msra.mxu0 %v1482
    %1601 = vmatprep.subr.bf16.mxu0 %v1476
    %1602 = vmatpush1.bf16.msra.mxu0 %v1475
    %1603 = vmatprep.subr.bf16.mxu0 0
    %1604 = vmatpush2.bf16.msra.mxu0 0
    %1605 = vmatprep.subr.bf16.mxu0 0
    %1606 = vmatpush2.bf16.msra.mxu0 0
    %1607 = vmatprep.subr.bf16.mxu0 0
    %1608 = vmatpush2.bf16.msra.mxu0 0
    %1609 = vmatprep.subr.bf16.mxu0 0
    %1610 = vmatpush2.bf16.msra.mxu0 0
    %1611 = vmatprep.subr.bf16.mxu0 0
    %1612 = vmatpush2.bf16.msra.mxu0 0
    %1613 = vmatprep.subr.bf16.mxu0 0
    %1614 = vmatpush2.bf16.msra.mxu0 0
    %1615 = vmatprep.subr.bf16.mxu0 0
    %1616 = vmatpush2.bf16.msra.mxu0 0
    %1617 = vmatprep.subr.bf16.mxu0 0
    %1618 = vmatpush2.bf16.msra.mxu0 0
    %1619 = vmatprep.mubr.bf16.mxu0 0
    %1620 = vmatmul.mubr.bf16.gmra.mxu0 %v1197
    %v1621 = vpop.f32.mrf.mxu0
    %v1622 = vadd.f32 %v1267, %v1621
    %v1623 = vpop.f32.mrf.mxu0
    %v1624 = vadd.f32 %v1271, %v1623
    %v1625 = vpop.f32.mrf.mxu0
    %v1626 = vpop.f32.mrf.mxu0
    %1627 = vdwg.mxu0
    %1628 = vmatprep.subr.bf16.mxu0 %v1527
    %1629 = vmatpush1.bf16.msra.mxu0 %v1526
    %1630 = vmatprep.subr.bf16.mxu0 %v1520
    %1631 = vmatpush1.bf16.msra.mxu0 %v1519
    %1632 = vmatprep.subr.bf16.mxu0 %v1513
    %1633 = vmatpush1.bf16.msra.mxu0 %v1512
    %1634 = vmatprep.subr.bf16.mxu0 %v1506
    %1635 = vmatpush1.bf16.msra.mxu0 %v1505
    %1636 = vmatprep.subr.bf16.mxu0 %v1499
    %1637 = vmatpush1.bf16.msra.mxu0 %v1498
    %1638 = vmatprep.subr.bf16.mxu0 %v1492
    %1639 = vmatpush1.bf16.msra.mxu0 %v1491
    %1640 = vmatprep.subr.bf16.mxu0 %v1485
    %1641 = vmatpush1.bf16.msra.mxu0 %v1484
    %1642 = vmatprep.subr.bf16.mxu0 %v1478
    %1643 = vmatpush1.bf16.msra.mxu0 %v1477
    %1644 = vmatprep.subr.bf16.mxu0 0
    %1645 = vmatpush2.bf16.msra.mxu0 0
    %1646 = vmatprep.subr.bf16.mxu0 0
    %1647 = vmatpush2.bf16.msra.mxu0 0
    %1648 = vmatprep.subr.bf16.mxu0 0
    %1649 = vmatpush2.bf16.msra.mxu0 0
    %1650 = vmatprep.subr.bf16.mxu0 0
    %1651 = vmatpush2.bf16.msra.mxu0 0
    %1652 = vmatprep.subr.bf16.mxu0 0
    %1653 = vmatpush2.bf16.msra.mxu0 0
    %1654 = vmatprep.subr.bf16.mxu0 0
    %1655 = vmatpush2.bf16.msra.mxu0 0
    %1656 = vmatprep.subr.bf16.mxu0 0
    %1657 = vmatpush2.bf16.msra.mxu0 0
    %1658 = vmatprep.subr.bf16.mxu0 0
    %1659 = vmatpush2.bf16.msra.mxu0 0
    %1660 = vmatprep.mubr.bf16.mxu0 0
    %1661 = vmatmul.mubr.bf16.gmra.mxu0 %v1197
    %v1662 = vpop.f32.mrf.mxu0
    %v1663 = vadd.f32 %v1275, %v1662
    %v1664 = vpop.f32.mrf.mxu0
    %v1665 = vadd.f32 %v1279, %v1664
    %v1666 = vpop.f32.mrf.mxu0
    %v1667 = vpop.f32.mrf.mxu0
    %1668 = vdwg.mxu0
    %1669 = vmatprep.subr.bf16.mxu0 %v1529
    %1670 = vmatpush1.bf16.msra.mxu0 %v1528
    %1671 = vmatprep.subr.bf16.mxu0 %v1522
    %1672 = vmatpush1.bf16.msra.mxu0 %v1521
    %1673 = vmatprep.subr.bf16.mxu0 %v1515
    %1674 = vmatpush1.bf16.msra.mxu0 %v1514
    %1675 = vmatprep.subr.bf16.mxu0 %v1508
    %1676 = vmatpush1.bf16.msra.mxu0 %v1507
    %1677 = vmatprep.subr.bf16.mxu0 %v1501
    %1678 = vmatpush1.bf16.msra.mxu0 %v1500
    %1679 = vmatprep.subr.bf16.mxu0 %v1494
    %1680 = vmatpush1.bf16.msra.mxu0 %v1493
    %1681 = vmatprep.subr.bf16.mxu0 %v1487
    %1682 = vmatpush1.bf16.msra.mxu0 %v1486
    %1683 = vmatprep.subr.bf16.mxu0 %v1480
    %1684 = vmatpush1.bf16.msra.mxu0 %v1479
    %1685 = vmatprep.subr.bf16.mxu0 0
    %1686 = vmatpush2.bf16.msra.mxu0 0
    %1687 = vmatprep.subr.bf16.mxu0 0
    %1688 = vmatpush2.bf16.msra.mxu0 0
    %1689 = vmatprep.subr.bf16.mxu0 0
    %1690 = vmatpush2.bf16.msra.mxu0 0
    %1691 = vmatprep.subr.bf16.mxu0 0
    %1692 = vmatpush2.bf16.msra.mxu0 0
    %1693 = vmatprep.subr.bf16.mxu0 0
    %1694 = vmatpush2.bf16.msra.mxu0 0
    %1695 = vmatprep.subr.bf16.mxu0 0
    %1696 = vmatpush2.bf16.msra.mxu0 0
    %1697 = vmatprep.subr.bf16.mxu0 0
    %1698 = vmatpush2.bf16.msra.mxu0 0
    %1699 = vmatprep.subr.bf16.mxu0 0
    %1700 = vmatpush2.bf16.msra.mxu0 0
    %1701 = vmatprep.mubr.bf16.mxu0 0
    %1702 = vmatmul.mubr.bf16.gmra.mxu0 %v1197
    %v1703 = vpop.f32.mrf.mxu0
    %v1704 = vadd.f32 %v1283, %v1703
    %v1705 = vpop.f32.mrf.mxu0
    %v1706 = vadd.f32 %v1287, %v1705
    %v1707 = vpop.f32.mrf.mxu0
    %v1708 = vpop.f32.mrf.mxu0
    %1709 = vdwg.mxu0
    %1710 = vmatprep.subr.bf16.mxu0 0
    %1711 = vmatpush1.bf16.msra.mxu0 %v1530
    %1712 = vmatprep.subr.bf16.mxu0 0
    %1713 = vmatpush1.bf16.msra.mxu0 %v1523
    %1714 = vmatprep.subr.bf16.mxu0 0
    %1715 = vmatpush1.bf16.msra.mxu0 %v1516
    %1716 = vmatprep.subr.bf16.mxu0 0
    %1717 = vmatpush1.bf16.msra.mxu0 %v1509
    %1718 = vmatprep.subr.bf16.mxu0 0
    %1719 = vmatpush1.bf16.msra.mxu0 %v1502
    %1720 = vmatprep.subr.bf16.mxu0 0
    %1721 = vmatpush1.bf16.msra.mxu0 %v1495
    %1722 = vmatprep.subr.bf16.mxu0 0
    %1723 = vmatpush1.bf16.msra.mxu0 %v1488
    %1724 = vmatprep.subr.bf16.mxu0 0
    %1725 = vmatpush1.bf16.msra.mxu0 %v1481
    %1726 = vmatprep.subr.bf16.mxu0 0
    %1727 = vmatpush2.bf16.msra.mxu0 0
    %1728 = vmatprep.subr.bf16.mxu0 0
    %1729 = vmatpush2.bf16.msra.mxu0 0
    %1730 = vmatprep.subr.bf16.mxu0 0
    %1731 = vmatpush2.bf16.msra.mxu0 0
    %1732 = vmatprep.subr.bf16.mxu0 0
    %1733 = vmatpush2.bf16.msra.mxu0 0
    %1734 = vmatprep.subr.bf16.mxu0 0
    %1735 = vmatpush2.bf16.msra.mxu0 0
    %1736 = vmatprep.subr.bf16.mxu0 0
    %1737 = vmatpush2.bf16.msra.mxu0 0
    %1738 = vmatprep.subr.bf16.mxu0 0
    %1739 = vmatpush2.bf16.msra.mxu0 0
    %1740 = vmatprep.subr.bf16.mxu0 0
    %1741 = vmatpush2.bf16.msra.mxu0 0
    %1742 = vmatprep.mubr.bf16.mxu0 0
    %1743 = vmatmul.mubr.bf16.gmra.mxu0 %v1197
    %v1744 = vpop.f32.mrf.mxu0
    %v1745 = vadd.f32 %v1291, %v1744
    %v1746 = vpop.f32.mrf.mxu0
    %v1747 = vpop.f32.mrf.mxu0
    %v1748 = vpop.f32.mrf.mxu0
    %1749 = vdwg.mxu0
    %v1750 = vtanh.pop %v1622
    %v1751 = vtanh.pop %v1624
    %v1752 = vtanh.pop %v1663
    %v1753 = vtanh.pop %v1665
    %v1754 = vtanh.pop %v1704
    %v1755 = vtanh.pop %v1706
    %v1756 = vtanh.pop %v1745
    %v1764 = vcombine.low %v1750, %v1751
    %v1765 = vcombine.low %v1752, %v1753
    %v1767 = vunpack.c.l.s4 1983009808
    %v1768 = vunpack.c.0.s8 %v1767
    %v1769 = vlaneseq
    %v1770 = vshrl.u32 %v1769, 7
    %v1771 = vsub.s32 %v1768, %v1770
    %v1772 = vrot.slane %v1764, %v1771
    %v1774 = vunpack.c.l.s4 1983009808
    %v1775 = vunpack.c.0.s8 %v1774
    %v1776 = vlaneseq
    %v1777 = vshrl.u32 %v1776, 7
    %v1778 = vsub.s32 %v1775, %v1777
    %v1779 = vrot.slane %v1765, %v1778
    %v1780 = vcombine.low %v1772, %v1779
    %v1781 = vcombine.low %v1754, %v1755
    %v1783 = vunpack.c.l.s4 1983009808
    %v1784 = vunpack.c.0.s8 %v1783
    %v1785 = vlaneseq
    %v1786 = vshrl.u32 %v1785, 7
    %v1787 = vsub.s32 %v1784, %v1786
    %v1788 = vrot.slane %v1781, %v1787
    %v1790 = vunpack.c.l.s4 1983009808
    %v1791 = vunpack.c.0.s8 %v1790
    %v1792 = vlaneseq
    %v1793 = vshrl.u32 %v1792, 7
    %v1794 = vsub.s32 %v1791, %v1793
    %v1795 = vrot.slane %v1756, %v1794
    %v1796 = vcombine.low %v1788, %v1795
    %1799 = vst [vmem:[#allocation4] sm:$0xff] %v1780
    %vm1800 = vcmask 1041408
    %vm1801 = vcmask 1043458
    %vm1802 = vmor %vm1801, %vm1800
    %vm1803 = vcmask 128004
    %vm1804 = vmor %vm1803, %vm1802
    %1805 = vst.msk [vmem:[#allocation4 + $0x8] sm:$0x3f] %vm1804, %v1796
    // Predicated region
    $region70: #{aumnist_forward.1} parent=1 // pred_check
      _
    $region71: #{aumnist_forward.1} parent=1 // pred_check_branch
      %1807 = sbr.rel (0) target = $region73
    $region72: #{aumnist_forward.1} parent=1 // pred_region
      %s1809 = ssub.s32 32, 32
      %1810 = vsyncadd [#allocation3], %s1809
      %s1812 = sshll.u32 [#allocation2], 4
      %s1813 = int_to_ptr.vmem [resolvable:$true] %s1812
      %1815 = dma.vmem_to_hbm [thread:$0]  %s1813, 32, %s17, [#allocation3]
    $region73: #{aumnist_forward.1} parent=1 // pred_fallthru
      _
    // Predicated region
    $region74: #{aumnist_forward.1} parent=1 // pred_check
      _
    $region75: #{aumnist_forward.1} parent=1 // pred_check_branch
      %1817 = sbr.rel (0) target = $region77
    $region76: #{aumnist_forward.1} parent=1 // pred_region
      %s1819 = ssub.s32 224, 224
      %1820 = vsyncadd [#allocation5], %s1819
      %s1822 = sshll.u32 [#allocation4], 4
      %s1823 = int_to_ptr.vmem [resolvable:$true] %s1822
      %1825 = dma.vmem_to_hbm [thread:$0]  %s1823, 224, %s18, [#allocation5]
    $region77: #{aumnist_forward.1} parent=1 // pred_fallthru
      _
    // Predicated region
    $region78: #{aumnist_forward.1} parent=1 // pred_check
      _
    $region79: #{aumnist_forward.1} parent=1 // pred_check_branch
      %1827 = sbr.rel (0) target = $region81
    $region80: #{aumnist_forward.1} parent=1 // pred_region
      %1828 = dma.done [#allocation3], 32
    $region81: #{aumnist_forward.1} parent=1 // pred_fallthru
      _
    // Predicated region
    $region82: #{aumnist_forward.1} parent=1 // pred_check
      _
    $region83: #{aumnist_forward.1} parent=1 // pred_check_branch
      %1830 = sbr.rel (0) target = $region85
    $region84: #{aumnist_forward.1} parent=1 // pred_region
      %1831 = dma.done [#allocation5], 224
    $region85: #{aumnist_forward.1} parent=1 // pred_fallthru
      _
    %1832 = vsyncpa [#allocation3], 1
    %1833 = vsyncpa [#allocation5], 1

</llo_original>
